<compile_context>
chip_gen: v7x
topology: tpu7x:2x2x1
jax: 0.10.0
libtpu: 0.0.40
codegen_flags: <defaults>
</compile_context>

<pallas_src>
import functools

import jax
import jax.numpy as jnp
from jax import lax
from jax.experimental import pallas as pl
from jax.experimental.pallas import tpu as pltpu

# Contract the *last* dim of both operands: A[M,K] . B[N,K] -> [M,N] (no .T needed).
_DN_NT = (((1,), (1,)), ((), ()))


def _pick_tile(dim, cap, align=128):
    """Largest aligned divisor of `dim` that is <= cap; falls back to full dim."""
    if dim <= cap:
        return dim
    t = (cap // align) * align
    while t >= align:
        if dim % t == 0:
            return t
        t -= align
    return dim


# ---------------------------------------------------------------------------
# Fused shared-expert GatedMLP + router gate logits
# ---------------------------------------------------------------------------
def _shared_gate_kernel(x_ref, wg_ref, wu_ref, wd_ref, gw_ref,
                        shared_ref, logits_ref, acc_ref):
    it = pl.program_id(1)
    x = x_ref[...]                                    # (tT, H) bf16 -> MXU directly

    @pl.when(it == 0)
    def _():
        acc_ref[...] = jnp.zeros_like(acc_ref)
        # Router GEMM (out_dtype=f32, matches cublas_mm) computed once per token tile.
        logits_ref[...] = lax.dot_general(x, gw_ref[...], _DN_NT,
                                          preferred_element_type=jnp.float32)

    g = lax.dot_general(x, wg_ref[...], _DN_NT, preferred_element_type=jnp.float32)
    u = lax.dot_general(x, wu_ref[...], _DN_NT, preferred_element_type=jnp.float32)
    h = (g * jax.nn.sigmoid(g)) * u                   # SiLU(g) * u, f32
    acc_ref[...] += lax.dot_general(h.astype(x.dtype), wd_ref[...], _DN_NT,
                                    preferred_element_type=jnp.float32)

    @pl.when(it == pl.num_programs(1) - 1)
    def _():
        shared_ref[...] = acc_ref[...].astype(shared_ref.dtype)


def shared_and_gate(x, s_wg, s_wu, s_wd, gate_w, *, t_cap=256, i_cap=1024):
    T, H = x.shape
    I = s_wg.shape[0]
    E = gate_w.shape[0]
    tT = _pick_tile(T, t_cap, align=8)
    tI = _pick_tile(I, i_cap, align=128)
    grid = (T // tT, I // tI)
    return pl.pallas_call(
        _shared_gate_kernel,
        out_shape=(jax.ShapeDtypeStruct((T, H), x.dtype),
                   jax.ShapeDtypeStruct((T, E), jnp.float32)),
        grid_spec=pltpu.PrefetchScalarGridSpec(
            num_scalar_prefetch=0,
            grid=grid,
            in_specs=[
                pl.BlockSpec((tT, H), lambda t, it: (t, 0)),
                pl.BlockSpec((tI, H), lambda t, it: (it, 0)),
                pl.BlockSpec((tI, H), lambda t, it: (it, 0)),
                pl.BlockSpec((H, tI), lambda t, it: (0, it)),
                pl.BlockSpec((E, H), lambda t, it: (0, 0)),
            ],
            out_specs=[pl.BlockSpec((tT, H), lambda t, it: (t, 0)),
                       pl.BlockSpec((tT, E), lambda t, it: (t, 0))],
            scratch_shapes=[pltpu.VMEM((tT, H), jnp.float32)],
        ),
        compiler_params=pltpu.CompilerParams(
            dimension_semantics=("parallel", "arbitrary"),
            vmem_limit_bytes=48 * 1024 * 1024,
        ),
    )(x, s_wg, s_wu, s_wd, gate_w)


# ---------------------------------------------------------------------------
# Routed experts (+ shared residual folded into accumulator init)
# ---------------------------------------------------------------------------
def _moe_kernel(ids_ref, cnt_ref, x_ref, wg_ref, wu_ref, wd_ref, rw_ref, shared_ref,
                o_ref, acc_ref):
    e = pl.program_id(1)
    it = pl.program_id(2)

    @pl.when((e == 0) & (it == 0))
    def _():
        # Fold the shared-expert output into the accumulator init.
        acc_ref[...] = shared_ref[...].astype(jnp.float32)

    @pl.when(e < cnt_ref[0])          # skip compute for padded (inactive) expert slots
    def _():
        x = x_ref[...]                # (tT, H)  bf16
        wg = wg_ref[0]                # (tI, H)  bf16
        wu = wu_ref[0]                # (tI, H)
        wd = wd_ref[0]                # (H, tI)
        g = lax.dot_general(x, wg, _DN_NT, preferred_element_type=jnp.float32)
        u = lax.dot_general(x, wu, _DN_NT, preferred_element_type=jnp.float32)
        h = (g * jax.nn.sigmoid(g)) * u               # (tT, tI) f32
        h = h * rw_ref[0]                             # scale per-token on the small I dim
        acc_ref[...] += lax.dot_general(h.astype(x.dtype), wd, _DN_NT,
                                        preferred_element_type=jnp.float32)

    @pl.when((e == pl.num_programs(1) - 1) & (it == pl.num_programs(2) - 1))
    def _():
        o_ref[...] = acc_ref[...].astype(o_ref.dtype)


def moe_routed_plus_shared(x, e_wg, e_wu, e_wd, slot_ids, num_active, rw_slots,
                           shared_out, *, t_cap=256, i_cap=512):
    T, H = x.shape
    E, I, _ = e_wg.shape
    E_slots = slot_ids.shape[0]
    tT = _pick_tile(T, t_cap, align=8)
    tI = _pick_tile(I, i_cap, align=128)
    n_it = I // tI
    grid = (T // tT, E_slots, n_it)

    # Index maps use the scalar-prefetched active-expert ids so inactive slots
    # repeat the previous block index -> their weight DMAs are skipped entirely.
    def _freeze_it(e, it, cnt):
        inactive = (e >= cnt[0]).astype(jnp.int32)
        return it + inactive * (n_it - 1 - it)

    def wg_map(t, e, it, ids, cnt):
        return (ids[e], _freeze_it(e, it, cnt), 0)

    def wu_map(t, e, it, ids, cnt):
        return (ids[e], _freeze_it(e, it, cnt), 0)

    def wd_map(t, e, it, ids, cnt):
        return (ids[e], 0, _freeze_it(e, it, cnt))

    return pl.pallas_call(
        _moe_kernel,
        out_shape=jax.ShapeDtypeStruct((T, H), x.dtype),
        grid_spec=pltpu.PrefetchScalarGridSpec(
            num_scalar_prefetch=2,
            grid=grid,
            in_specs=[
                pl.BlockSpec((tT, H), lambda t, e, it, ids, cnt: (t, 0)),
                pl.BlockSpec((1, tI, H), wg_map),
                pl.BlockSpec((1, tI, H), wu_map),
                pl.BlockSpec((1, H, tI), wd_map),
                pl.BlockSpec((1, tT, 1), lambda t, e, it, ids, cnt: (e, t, 0)),
                pl.BlockSpec((tT, H), lambda t, e, it, ids, cnt: (t, 0)),
            ],
            out_specs=pl.BlockSpec((tT, H), lambda t, e, it, ids, cnt: (t, 0)),
            scratch_shapes=[pltpu.VMEM((tT, H), jnp.float32)],
        ),
        compiler_params=pltpu.CompilerParams(
            dimension_semantics=("parallel", "arbitrary", "arbitrary"),
            vmem_limit_bytes=48 * 1024 * 1024,
        ),
    )(slot_ids, num_active, x, e_wg, e_wu, e_wd, rw_slots, shared_out)


# ---------------------------------------------------------------------------
# Routing (noaux_tc, is_thop=False path) — small top_k / masking logic, JAX glue
# ---------------------------------------------------------------------------
def noaux_tc_routing(logits, e_score_correction_bias, n_group, topk_group, top_k,
                     routed_scaling_factor):
    scores = jax.nn.sigmoid(logits)                                  # (T, E) f32
    swb = scores + e_score_correction_bias[None, :]
    T, E = scores.shape
    gsz = E // n_group

    grp = swb.reshape(T, n_group, gsz)
    top2_vals, _ = lax.top_k(grp, 2)                                 # (T, n_group, 2)
    group_scores = top2_vals.sum(-1)                                 # (T, n_group)
    _, group_idx = lax.top_k(group_scores, topk_group)               # (T, topk_group)
    group_mask = jnp.sum(jax.nn.one_hot(group_idx, n_group, dtype=swb.dtype), axis=1)
    score_mask = jnp.broadcast_to(group_mask[:, :, None], (T, n_group, gsz)).reshape(T, E)

    swb_masked = swb * score_mask                       # matches reference (mask-to-0)
    _, topk_idx = lax.top_k(swb_masked, top_k)
    new_mask = jnp.sum(jax.nn.one_hot(topk_idx, E, dtype=scores.dtype), axis=1)
    scores_m = scores * new_mask
    score_sum = scores_m.sum(-1, keepdims=True) + 1e-20
    scores_n = scores_m / score_sum * routed_scaling_factor
    topk_values, topk_indices = lax.top_k(scores_n, top_k)
    return topk_indices.astype(jnp.int32), topk_values.astype(jnp.float32)


# ---------------------------------------------------------------------------
# Full forward
# ---------------------------------------------------------------------------
def deepseekv3_moe_forward(x, gate_w, e_bias, s_wg, s_wu, s_wd, e_wg, e_wu, e_wd,
                           *, top_k, n_group, topk_group, routed_scaling_factor):
    T, H = x.shape
    E = gate_w.shape[0]

    # Shared experts (GatedMLP) fused with the router GEMM -> one pallas_call.
    shared_out, logits = shared_and_gate(x, s_wg, s_wu, s_wd, gate_w)

    topk_idx, topk_vals = noaux_tc_routing(
        logits, e_bias, n_group, topk_group, top_k, routed_scaling_factor)

    # Dense (T, E) routing weights (zero where expert not selected).
    rw_dense = jnp.zeros((T, E), jnp.float32).at[
        jnp.arange(T)[:, None], topk_idx].set(topk_vals)

    # Compact the active experts so the MoE kernel never touches unrouted weights.
    E_slots = min(E, T * top_k)                         # static upper bound on active experts
    hit = jnp.zeros((E,), jnp.bool_).at[topk_idx.reshape(-1)].set(True)
    num_active = jnp.sum(hit).astype(jnp.int32)
    key = jnp.where(hit, jnp.arange(E, dtype=jnp.int32), E + jnp.arange(E, dtype=jnp.int32))
    order = jnp.argsort(key).astype(jnp.int32)          # active expert ids first
    last_active = order[jnp.maximum(num_active - 1, 0)]
    slot_pos = jnp.arange(E_slots, dtype=jnp.int32)
    slot_ids = jnp.where(slot_pos < num_active, order[:E_slots], last_active)
    rw_slots = jnp.take(rw_dense.T, slot_ids, axis=0)[..., None]    # (E_slots, T, 1) f32
    num_active_arr = num_active.reshape(1)

    # Routed experts + shared residual (accumulator init), fused in one Pallas kernel.
    return moe_routed_plus_shared(x, e_wg, e_wu, e_wd, slot_ids, num_active_arr,
                                  rw_slots, shared_out)


# ---------------------------------------------------------------------------
# Pure-JAX reference (same precision policy: bf16 MXU operands, f32 accumulation)
# ---------------------------------------------------------------------------
def _reference(x, gate_w, e_bias, s_wg, s_wu, s_wd, e_wg, e_wu, e_wd, *,
               top_k, n_group, topk_group, routed_scaling_factor):
    def gated(xx, wg, wu, wd):
        g = jnp.dot(xx, wg.T, preferred_element_type=jnp.float32)
        u = jnp.dot(xx, wu.T, preferred_element_type=jnp.float32)
        h = (g * jax.nn.sigmoid(g)) * u
        return jnp.dot(h.astype(xx.dtype), wd.T, preferred_element_type=jnp.float32)

    T, H = x.shape
    E = gate_w.shape[0]
    shared = gated(x, s_wg, s_wu, s_wd).astype(x.dtype).astype(jnp.float32)
    logits = jnp.dot(x, gate_w.T, preferred_element_type=jnp.float32)
    ti, tv = noaux_tc_routing(logits, e_bias, n_group, topk_group, top_k,
                              routed_scaling_factor)
    rw = jnp.zeros((T, E), jnp.float32).at[jnp.arange(T)[:, None], ti].set(tv)
    out = shared
    for e in range(E):
        g = jnp.dot(x, e_wg[e].T, preferred_element_type=jnp.float32)
        u = jnp.dot(x, e_wu[e].T, preferred_element_type=jnp.float32)
        h = (g * jax.nn.sigmoid(g)) * u * rw[:, e:e + 1]
        out = out + jnp.dot(h.astype(x.dtype), e_wd[e].T,
                            preferred_element_type=jnp.float32)
    return out.astype(x.dtype)


if __name__ == "__main__":
    T, H = 8, 128                  # tokens, hidden_size
    E, I_r, I_s = 16, 64, 128      # num_experts, routed intermediate, shared intermediate
    top_k, n_group, topk_group = 4, 4, 2
    routed_scaling_factor = 2.5
    dtype = jnp.bfloat16

    key = jax.random.PRNGKey(0)
    ks = jax.random.split(key, 9)
    x      = (jax.random.normal(ks[0], (T, H), jnp.float32) * 0.5).astype(dtype)
    gate_w = (jax.random.normal(ks[1], (E, H), jnp.float32) * 0.05).astype(dtype)
    e_bias =  jax.random.normal(ks[2], (E,), jnp.float32) * 0.1
    s_wg   = (jax.random.normal(ks[3], (I_s, H), jnp.float32) * 0.05).astype(dtype)
    s_wu   = (jax.random.normal(ks[4], (I_s, H), jnp.float32) * 0.05).astype(dtype)
    s_wd   = (jax.random.normal(ks[5], (H, I_s), jnp.float32) * 0.05).astype(dtype)
    e_wg   = (jax.random.normal(ks[6], (E, I_r, H), jnp.float32) * 0.05).astype(dtype)
    e_wu   = (jax.random.normal(ks[7], (E, I_r, H), jnp.float32) * 0.05).astype(dtype)
    e_wd   = (jax.random.normal(ks[8], (E, H, I_r), jnp.float32) * 0.05).astype(dtype)

    fwd = jax.jit(functools.partial(
        deepseekv3_moe_forward, top_k=top_k, n_group=n_group, topk_group=topk_group,
        routed_scaling_factor=routed_scaling_factor))
    out = fwd(x, gate_w, e_bias, s_wg, s_wu, s_wd, e_wg, e_wu, e_wd)
    jax.block_until_ready(out)

    ref = _reference(x, gate_w, e_bias, s_wg, s_wu, s_wd, e_wg, e_wu, e_wd,
                     top_k=top_k, n_group=n_group, topk_group=topk_group,
                     routed_scaling_factor=routed_scaling_factor)

    assert out.shape == (T, H) and out.dtype == dtype
    assert bool(jnp.all(jnp.isfinite(out.astype(jnp.float32))))
    assert bool(jnp.allclose(out.astype(jnp.float32), ref.astype(jnp.float32),
                             atol=2e-2, rtol=2e-2))
    print("KERNEL_OK")
</pallas_src>

<mosaic_0001>
module attributes {stable_mosaic.version = 11 : i64} {
  func.func @_shared_gate_kernel(%arg0: i32, %arg1: i32, %arg2: memref<8x128xbf16, #tpu.memory_space<vmem>>, %arg3: memref<128x128xbf16, #tpu.memory_space<vmem>>, %arg4: memref<128x128xbf16, #tpu.memory_space<vmem>>, %arg5: memref<128x128xbf16, #tpu.memory_space<vmem>>, %arg6: memref<16x128xbf16, #tpu.memory_space<vmem>>, %arg7: memref<8x128xbf16, #tpu.memory_space<vmem>>, %arg8: memref<8x16xf32, #tpu.memory_space<vmem>>, %arg9: memref<8x128xf32, #tpu.memory_space<vmem>>) attributes {dimension_semantics = [#tpu.dimension_semantics<parallel>, #tpu.dimension_semantics<arbitrary>], iteration_bounds = array<i64: 1, 1>, scalar_prefetch = 0 : i64, scratch_operands = 1 : i64, tpu.core_type = #tpu.core_type<tc>, window_params = [{transform_indices = @transform_0, window_bounds = array<i64: 8, 128>}, {transform_indices = @transform_1, window_bounds = array<i64: 128, 128>}, {transform_indices = @transform_2, window_bounds = array<i64: 128, 128>}, {transform_indices = @transform_3, window_bounds = array<i64: 128, 128>}, {pipeline_mode = #tpu.pipeline_mode<synchronous>, transform_indices = @transform_4, window_bounds = array<i64: 16, 128>}, {transform_indices = @transform_5, window_bounds = array<i64: 8, 128>}, {transform_indices = @transform_6, window_bounds = array<i64: 8, 16>}]} {
    %c0 = arith.constant 0 : index
    %c0_0 = arith.constant 0 : index
    %0 = vector.load %arg2[%c0, %c0_0] : memref<8x128xbf16, #tpu.memory_space<vmem>>, vector<8x128xbf16>
    %c0_i32 = arith.constant 0 : i32
    %1 = arith.cmpi eq, %arg1, %c0_i32 : i32
    %2 = arith.extui %1 : i1 to i32
    %c0_i32_1 = arith.constant 0 : i32
    %3 = arith.cmpi ne, %2, %c0_i32_1 : i32
    scf.if %3 {
      %cst_17 = arith.constant 0.000000e+00 : f32
      %24 = vector.broadcast %cst_17 : f32 to vector<8x128xf32>
      %c0_18 = arith.constant 0 : index
      %c0_19 = arith.constant 0 : index
      %25 = vector.load %arg9[%c0_18, %c0_19] : memref<8x128xf32, #tpu.memory_space<vmem>>, vector<8x128xf32>
      tpu.vector_store %arg9[%c0_18, %c0_19], %24 {strides = array<i32>} : memref<8x128xf32, #tpu.memory_space<vmem>>, vector<8x128xf32>,
      %c0_20 = arith.constant 0 : index
      %c0_21 = arith.constant 0 : index
      %26 = vector.load %arg6[%c0_20, %c0_21] : memref<16x128xbf16, #tpu.memory_space<vmem>>, vector<16x128xbf16>
      %cst_22 = arith.constant dense<0.000000e+00> : vector<8x16xf32>
      %27 = tpu.matmul %0, %26, %cst_22 {dimension_numbers = #tpu.dot_dimension_numbers<[1], [1], [0], [0], [0, 0, 1, 0], [], []>} : vector<8x128xbf16>, vector<16x128xbf16>, vector<8x16xf32> -> vector<8x16xf32>
      %c0_23 = arith.constant 0 : index
      %c0_24 = arith.constant 0 : index
      %28 = vector.load %arg8[%c0_23, %c0_24] : memref<8x16xf32, #tpu.memory_space<vmem>>, vector<8x16xf32>
      tpu.vector_store %arg8[%c0_23, %c0_24], %27 {strides = array<i32>} : memref<8x16xf32, #tpu.memory_space<vmem>>, vector<8x16xf32>,
    } else {
    }
    %c0_2 = arith.constant 0 : index
    %c0_3 = arith.constant 0 : index
    %4 = vector.load %arg3[%c0_2, %c0_3] : memref<128x128xbf16, #tpu.memory_space<vmem>>, vector<128x128xbf16>
    %cst = arith.constant dense<0.000000e+00> : vector<8x128xf32>
    %5 = tpu.matmul %0, %4, %cst {dimension_numbers = #tpu.dot_dimension_numbers<[1], [1], [0], [0], [0, 0, 1, 0], [], []>} : vector<8x128xbf16>, vector<128x128xbf16>, vector<8x128xf32> -> vector<8x128xf32>
    %c0_4 = arith.constant 0 : index
    %c0_5 = arith.constant 0 : index
    %6 = vector.load %arg4[%c0_4, %c0_5] : memref<128x128xbf16, #tpu.memory_space<vmem>>, vector<128x128xbf16>
    %cst_6 = arith.constant dense<0.000000e+00> : vector<8x128xf32>
    %7 = tpu.matmul %0, %6, %cst_6 {dimension_numbers = #tpu.dot_dimension_numbers<[1], [1], [0], [0], [0, 0, 1, 0], [], []>} : vector<8x128xbf16>, vector<128x128xbf16>, vector<8x128xf32> -> vector<8x128xf32>
    %8 = arith.negf %5 : vector<8x128xf32>
    %9 = math.exp %8 : vector<8x128xf32>
    %cst_7 = arith.constant 1.000000e+00 : f32
    %10 = vector.broadcast %cst_7 : f32 to vector<8x128xf32>
    %11 = arith.addf %10, %9 : vector<8x128xf32>
    %12 = arith.divf %10, %11 : vector<8x128xf32>
    %13 = arith.mulf %5, %12 : vector<8x128xf32>
    %14 = arith.mulf %13, %7 : vector<8x128xf32>
    %c0_8 = arith.constant 0 : index
    %c0_9 = arith.constant 0 : index
    %15 = vector.load %arg9[%c0_8, %c0_9] : memref<8x128xf32, #tpu.memory_space<vmem>>, vector<8x128xf32>
    %16 = arith.truncf %14 : vector<8x128xf32> to vector<8x128xbf16>
    %c0_10 = arith.constant 0 : index
    %c0_11 = arith.constant 0 : index
    %17 = vector.load %arg5[%c0_10, %c0_11] : memref<128x128xbf16, #tpu.memory_space<vmem>>, vector<128x128xbf16>
    %cst_12 = arith.constant dense<0.000000e+00> : vector<8x128xf32>
    %18 = tpu.matmul %16, %17, %cst_12 {dimension_numbers = #tpu.dot_dimension_numbers<[1], [1], [0], [0], [0, 0, 1, 0], [], []>} : vector<8x128xbf16>, vector<128x128xbf16>, vector<8x128xf32> -> vector<8x128xf32>
    %19 = arith.addf %15, %18 : vector<8x128xf32>
    %c0_13 = arith.constant 0 : index
    %c0_14 = arith.constant 0 : index
    %20 = vector.load %arg9[%c0_13, %c0_14] : memref<8x128xf32, #tpu.memory_space<vmem>>, vector<8x128xf32>
    tpu.vector_store %arg9[%c0_13, %c0_14], %19 {strides = array<i32>} : memref<8x128xf32, #tpu.memory_space<vmem>>, vector<8x128xf32>,
    %c0_i32_15 = arith.constant 0 : i32
    %21 = arith.cmpi eq, %arg1, %c0_i32_15 : i32
    %22 = arith.extui %21 : i1 to i32
    %c0_i32_16 = arith.constant 0 : i32
    %23 = arith.cmpi ne, %22, %c0_i32_16 : i32
    scf.if %23 {
      %c0_17 = arith.constant 0 : index
      %c0_18 = arith.constant 0 : index
      %24 = vector.load %arg9[%c0_17, %c0_18] : memref<8x128xf32, #tpu.memory_space<vmem>>, vector<8x128xf32>
      %25 = arith.truncf %24 : vector<8x128xf32> to vector<8x128xbf16>
      %c0_19 = arith.constant 0 : index
      %c0_20 = arith.constant 0 : index
      %26 = vector.load %arg7[%c0_19, %c0_20] : memref<8x128xbf16, #tpu.memory_space<vmem>>, vector<8x128xbf16>
      tpu.vector_store %arg7[%c0_19, %c0_20], %25 {strides = array<i32>} : memref<8x128xbf16, #tpu.memory_space<vmem>>, vector<8x128xbf16>,
    } else {
    }
    return
  }
  func.func @transform_0(%arg0: i32, %arg1: i32) -> (i32, i32) {
    %c0_i32 = arith.constant 0 : i32
    %c0_i32_0 = arith.constant 0 : i32
    return %arg0, %c0_i32 : i32, i32
  }
  func.func @transform_1(%arg0: i32, %arg1: i32) -> (i32, i32) {
    %c0_i32 = arith.constant 0 : i32
    %c0_i32_0 = arith.constant 0 : i32
    return %arg1, %c0_i32 : i32, i32
  }
  func.func @transform_2(%arg0: i32, %arg1: i32) -> (i32, i32) {
    %c0_i32 = arith.constant 0 : i32
    %c0_i32_0 = arith.constant 0 : i32
    return %arg1, %c0_i32 : i32, i32
  }
  func.func @transform_3(%arg0: i32, %arg1: i32) -> (i32, i32) {
    %c0_i32 = arith.constant 0 : i32
    %c0_i32_0 = arith.constant 0 : i32
    return %c0_i32, %arg1 : i32, i32
  }
  func.func @transform_4(%arg0: i32, %arg1: i32) -> (i32, i32) {
    %c0_i32 = arith.constant 0 : i32
    %c0_i32_0 = arith.constant 0 : i32
    %c0_i32_1 = arith.constant 0 : i32
    return %c0_i32, %c0_i32_0 : i32, i32
  }
  func.func @transform_5(%arg0: i32, %arg1: i32) -> (i32, i32) {
    %c0_i32 = arith.constant 0 : i32
    %c0_i32_0 = arith.constant 0 : i32
    return %arg0, %c0_i32 : i32, i32
  }
  func.func @transform_6(%arg0: i32, %arg1: i32) -> (i32, i32) {
    %c0_i32 = arith.constant 0 : i32
    %c0_i32_0 = arith.constant 0 : i32
    return %arg0, %c0_i32 : i32, i32
  }
}

module attributes {stable_mosaic.version = 11 : i64} {
  func.func @_moe_kernel(%arg0: i32, %arg1: i32, %arg2: i32, %arg3: memref<16xi32, #tpu.memory_space<smem>>, %arg4: memref<1xi32, #tpu.memory_space<smem>>, %arg5: memref<8x128xbf16, #tpu.memory_space<vmem>>, %arg6: memref<1x64x128xbf16, #tpu.memory_space<vmem>>, %arg7: memref<1x64x128xbf16, #tpu.memory_space<vmem>>, %arg8: memref<1x128x64xbf16, #tpu.memory_space<vmem>>, %arg9: memref<1x8x1xf32, #tpu.memory_space<vmem>>, %arg10: memref<8x128xbf16, #tpu.memory_space<vmem>>, %arg11: memref<8x128xbf16, #tpu.memory_space<vmem>>, %arg12: memref<8x128xf32, #tpu.memory_space<vmem>>) attributes {dimension_semantics = [#tpu.dimension_semantics<parallel>, #tpu.dimension_semantics<arbitrary>, #tpu.dimension_semantics<arbitrary>], iteration_bounds = array<i64: 1, 16, 1>, scalar_prefetch = 2 : i64, scratch_operands = 1 : i64, tpu.core_type = #tpu.core_type<tc>, window_params = [{transform_indices = @transform_0, window_bounds = array<i64: 8, 128>}, {transform_indices = @transform_1, window_bounds = array<i64: 1, 64, 128>}, {transform_indices = @transform_2, window_bounds = array<i64: 1, 64, 128>}, {transform_indices = @transform_3, window_bounds = array<i64: 1, 128, 64>}, {transform_indices = @transform_4, window_bounds = array<i64: 1, 8, 1>}, {transform_indices = @transform_5, window_bounds = array<i64: 8, 128>}, {transform_indices = @transform_6, window_bounds = array<i64: 8, 128>}]} {
    %c0_i32 = arith.constant 0 : i32
    %0 = arith.cmpi eq, %arg1, %c0_i32 : i32
    %c0_i32_0 = arith.constant 0 : i32
    %1 = arith.cmpi eq, %arg2, %c0_i32_0 : i32
    %2 = arith.andi %0, %1 : i1
    %3 = arith.extui %2 : i1 to i32
    %c0_i32_1 = arith.constant 0 : i32
    %4 = arith.cmpi ne, %3, %c0_i32_1 : i32
    scf.if %4 {
      %c0_5 = arith.constant 0 : index
      %c0_6 = arith.constant 0 : index
      %14 = vector.load %arg10[%c0_5, %c0_6] : memref<8x128xbf16, #tpu.memory_space<vmem>>, vector<8x128xbf16>
      %15 = arith.extf %14 : vector<8x128xbf16> to vector<8x128xf32>
      %c0_7 = arith.constant 0 : index
      %c0_8 = arith.constant 0 : index
      %16 = vector.load %arg12[%c0_7, %c0_8] : memref<8x128xf32, #tpu.memory_space<vmem>>, vector<8x128xf32>
      tpu.vector_store %arg12[%c0_7, %c0_8], %15 {strides = array<i32>} : memref<8x128xf32, #tpu.memory_space<vmem>>, vector<8x128xf32>,
    } else {
    }
    %c0 = arith.constant 0 : index
    %5 = memref.load %arg4[%c0] : memref<1xi32, #tpu.memory_space<smem>>
    %6 = arith.cmpi slt, %arg1, %5 : i32
    %7 = arith.extui %6 : i1 to i32
    %c0_i32_2 = arith.constant 0 : i32
    %8 = arith.cmpi ne, %7, %c0_i32_2 : i32
    scf.if %8 {
      %c0_5 = arith.constant 0 : index
      %c0_6 = arith.constant 0 : index
      %14 = vector.load %arg5[%c0_5, %c0_6] : memref<8x128xbf16, #tpu.memory_space<vmem>>, vector<8x128xbf16>
      %c0_7 = arith.constant 0 : index
      %c0_8 = arith.constant 0 : index
      %c0_9 = arith.constant 0 : index
      %15 = vector.load %arg6[%c0_7, %c0_8, %c0_9] : memref<1x64x128xbf16, #tpu.memory_space<vmem>>, vector<1x64x128xbf16>
      %16 = vector.shape_cast %15 : vector<1x64x128xbf16> to vector<64x128xbf16>
      %c0_10 = arith.constant 0 : index
      %c0_11 = arith.constant 0 : index
      %c0_12 = arith.constant 0 : index
      %17 = vector.load %arg7[%c0_10, %c0_11, %c0_12] : memref<1x64x128xbf16, #tpu.memory_space<vmem>>, vector<1x64x128xbf16>
      %18 = vector.shape_cast %17 : vector<1x64x128xbf16> to vector<64x128xbf16>
      %c0_13 = arith.constant 0 : index
      %c0_14 = arith.constant 0 : index
      %c0_15 = arith.constant 0 : index
      %19 = vector.load %arg8[%c0_13, %c0_14, %c0_15] : memref<1x128x64xbf16, #tpu.memory_space<vmem>>, vector<1x128x64xbf16>
      %20 = vector.shape_cast %19 : vector<1x128x64xbf16> to vector<128x64xbf16>
      %cst = arith.constant dense<0.000000e+00> : vector<8x64xf32>
      %21 = tpu.matmul %14, %16, %cst {dimension_numbers = #tpu.dot_dimension_numbers<[1], [1], [0], [0], [0, 0, 1, 0], [], []>} : vector<8x128xbf16>, vector<64x128xbf16>, vector<8x64xf32> -> vector<8x64xf32>
      %cst_16 = arith.constant dense<0.000000e+00> : vector<8x64xf32>
      %22 = tpu.matmul %14, %18, %cst_16 {dimension_numbers = #tpu.dot_dimension_numbers<[1], [1], [0], [0], [0, 0, 1, 0], [], []>} : vector<8x128xbf16>, vector<64x128xbf16>, vector<8x64xf32> -> vector<8x64xf32>
      %23 = arith.negf %21 : vector<8x64xf32>
      %24 = math.exp %23 : vector<8x64xf32>
      %cst_17 = arith.constant 1.000000e+00 : f32
      %25 = vector.broadcast %cst_17 : f32 to vector<8x64xf32>
      %26 = arith.addf %25, %24 : vector<8x64xf32>
      %27 = arith.divf %25, %26 : vector<8x64xf32>
      %28 = arith.mulf %21, %27 : vector<8x64xf32>
      %29 = arith.mulf %28, %22 : vector<8x64xf32>
      %c0_18 = arith.constant 0 : index
      %c0_19 = arith.constant 0 : index
      %c0_20 = arith.constant 0 : index
      %30 = vector.load %arg9[%c0_18, %c0_19, %c0_20] : memref<1x8x1xf32, #tpu.memory_space<vmem>>, vector<1x8x1xf32>
      %31 = vector.shape_cast %30 : vector<1x8x1xf32> to vector<8x1xf32>
      %32 = vector.broadcast %31 : vector<8x1xf32> to vector<8x64xf32>
      %33 = arith.mulf %29, %32 : vector<8x64xf32>
      %c0_21 = arith.constant 0 : index
      %c0_22 = arith.constant 0 : index
      %34 = vector.load %arg12[%c0_21, %c0_22] : memref<8x128xf32, #tpu.memory_space<vmem>>, vector<8x128xf32>
      %35 = arith.truncf %33 : vector<8x64xf32> to vector<8x64xbf16>
      %cst_23 = arith.constant dense<0.000000e+00> : vector<8x128xf32>
      %36 = tpu.matmul %35, %20, %cst_23 {dimension_numbers = #tpu.dot_dimension_numbers<[1], [1], [0], [0], [0, 0, 1, 0], [], []>} : vector<8x64xbf16>, vector<128x64xbf16>, vector<8x128xf32> -> vector<8x128xf32>
      %37 = arith.addf %34, %36 : vector<8x128xf32>
      %c0_24 = arith.constant 0 : index
      %c0_25 = arith.constant 0 : index
      %38 = vector.load %arg12[%c0_24, %c0_25] : memref<8x128xf32, #tpu.memory_space<vmem>>, vector<8x128xf32>
      tpu.vector_store %arg12[%c0_24, %c0_25], %37 {strides = array<i32>} : memref<8x128xf32, #tpu.memory_space<vmem>>, vector<8x128xf32>,
    } else {
    }
    %c15_i32 = arith.constant 15 : i32
    %9 = arith.cmpi eq, %arg1, %c15_i32 : i32
    %c0_i32_3 = arith.constant 0 : i32
    %10 = arith.cmpi eq, %arg2, %c0_i32_3 : i32
    %11 = arith.andi %9, %10 : i1
    %12 = arith.extui %11 : i1 to i32
    %c0_i32_4 = arith.constant 0 : i32
    %13 = arith.cmpi ne, %12, %c0_i32_4 : i32
    scf.if %13 {
      %c0_5 = arith.constant 0 : index
      %c0_6 = arith.constant 0 : index
      %14 = vector.load %arg12[%c0_5, %c0_6] : memref<8x128xf32, #tpu.memory_space<vmem>>, vector<8x128xf32>
      %15 = arith.truncf %14 : vector<8x128xf32> to vector<8x128xbf16>
      %c0_7 = arith.constant 0 : index
      %c0_8 = arith.constant 0 : index
      %16 = vector.load %arg11[%c0_7, %c0_8] : memref<8x128xbf16, #tpu.memory_space<vmem>>, vector<8x128xbf16>
      tpu.vector_store %arg11[%c0_7, %c0_8], %15 {strides = array<i32>} : memref<8x128xbf16, #tpu.memory_space<vmem>>, vector<8x128xbf16>,
    } else {
    }
    return
  }
  func.func @transform_0(%arg0: i32, %arg1: i32, %arg2: i32, %arg3: memref<16xi32, #tpu.memory_space<smem>>, %arg4: memref<1xi32, #tpu.memory_space<smem>>) -> (i32, i32) {
    %c0_i32 = arith.constant 0 : i32
    %c0_i32_0 = arith.constant 0 : i32
    return %arg0, %c0_i32 : i32, i32
  }
  func.func @transform_1(%arg0: i32, %arg1: i32, %arg2: i32, %arg3: memref<16xi32, #tpu.memory_space<smem>>, %arg4: memref<1xi32, #tpu.memory_space<smem>>) -> (i32, i32, i32) {
    %0 = arith.index_cast %arg1 : i32 to index
    %1 = memref.load %arg3[%0] : memref<16xi32, #tpu.memory_space<smem>>
    %c0 = arith.constant 0 : index
    %2 = memref.load %arg4[%c0] : memref<1xi32, #tpu.memory_space<smem>>
    %3 = arith.cmpi sge, %arg1, %2 : i32
    %4 = arith.extui %3 : i1 to i32
    %c0_i32 = arith.constant 0 : i32
    %5 = arith.subi %c0_i32, %arg2 : i32
    %6 = arith.muli %4, %5 : i32
    %7 = arith.addi %arg2, %6 : i32
    %c0_i32_0 = arith.constant 0 : i32
    %c0_i32_1 = arith.constant 0 : i32
    return %1, %7, %c0_i32_0 : i32, i32, i32
  }
  func.func @transform_2(%arg0: i32, %arg1: i32, %arg2: i32, %arg3: memref<16xi32, #tpu.memory_space<smem>>, %arg4: memref<1xi32, #tpu.memory_space<smem>>) -> (i32, i32, i32) {
    %0 = arith.index_cast %arg1 : i32 to index
    %1 = memref.load %arg3[%0] : memref<16xi32, #tpu.memory_space<smem>>
    %c0 = arith.constant 0 : index
    %2 = memref.load %arg4[%c0] : memref<1xi32, #tpu.memory_space<smem>>
    %3 = arith.cmpi sge, %arg1, %2 : i32
    %4 = arith.extui %3 : i1 to i32
    %c0_i32 = arith.constant 0 : i32
    %5 = arith.subi %c0_i32, %arg2 : i32
    %6 = arith.muli %4, %5 : i32
    %7 = arith.addi %arg2, %6 : i32
    %c0_i32_0 = arith.constant 0 : i32
    %c0_i32_1 = arith.constant 0 : i32
    return %1, %7, %c0_i32_0 : i32, i32, i32
  }
  func.func @transform_3(%arg0: i32, %arg1: i32, %arg2: i32, %arg3: memref<16xi32, #tpu.memory_space<smem>>, %arg4: memref<1xi32, #tpu.memory_space<smem>>) -> (i32, i32, i32) {
    %0 = arith.index_cast %arg1 : i32 to index
    %1 = memref.load %arg3[%0] : memref<16xi32, #tpu.memory_space<smem>>
    %c0 = arith.constant 0 : index
    %2 = memref.load %arg4[%c0] : memref<1xi32, #tpu.memory_space<smem>>
    %3 = arith.cmpi sge, %arg1, %2 : i32
    %4 = arith.extui %3 : i1 to i32
    %c0_i32 = arith.constant 0 : i32
    %5 = arith.subi %c0_i32, %arg2 : i32
    %6 = arith.muli %4, %5 : i32
    %7 = arith.addi %arg2, %6 : i32
    %c0_i32_0 = arith.constant 0 : i32
    %c0_i32_1 = arith.constant 0 : i32
    return %1, %c0_i32_0, %7 : i32, i32, i32
  }
  func.func @transform_4(%arg0: i32, %arg1: i32, %arg2: i32, %arg3: memref<16xi32, #tpu.memory_space<smem>>, %arg4: memref<1xi32, #tpu.memory_space<smem>>) -> (i32, i32, i32) {
    %c0_i32 = arith.constant 0 : i32
    %c0_i32_0 = arith.constant 0 : i32
    return %arg1, %arg0, %c0_i32 : i32, i32, i32
  }
  func.func @transform_5(%arg0: i32, %arg1: i32, %arg2: i32, %arg3: memref<16xi32, #tpu.memory_space<smem>>, %arg4: memref<1xi32, #tpu.memory_space<smem>>) -> (i32, i32) {
    %c0_i32 = arith.constant 0 : i32
    %c0_i32_0 = arith.constant 0 : i32
    return %arg0, %c0_i32 : i32, i32
  }
  func.func @transform_6(%arg0: i32, %arg1: i32, %arg2: i32, %arg3: memref<16xi32, #tpu.memory_space<smem>>, %arg4: memref<1xi32, #tpu.memory_space<smem>>) -> (i32, i32) {
    %c0_i32 = arith.constant 0 : i32
    %c0_i32_0 = arith.constant 0 : i32
    return %arg0, %c0_i32 : i32, i32
  }
}

</mosaic_0001>

<llo_original>
// kernel: deepseekv3_moe_forward.2
$region0: #{deepseekv3_moe_forward.2}
  #allocation0 [shape = 'u32[]', space=smem, size = 0x4, offset = 0x4, fixed_abs, tag = 'smem constant byte address 0x4 - core index']
  #allocation1 [shape = 'u32[144,128]{1,0:T(1,128)}', space=vmem, size = 0x12000, scoped, tag = 'internal scratch']
  #allocation2 [shape = 'f32[8,128]{1,0:T(8,128)}', space=vmem, size = 0x1000, scoped, tag = 'scratch operand']
  %s0 = inlined_call_operand.vmem [shape: bf16[8,128], index: 0, kind: input, shape index: {}]
  %s1 = inlined_call_operand.hbm [shape: bf16[128,128], index: 1, kind: input, shape index: {}]
  %s2 = inlined_call_operand.hbm [shape: bf16[128,128], index: 2, kind: input, shape index: {}]
  %s3 = inlined_call_operand.hbm [shape: bf16[128,128], index: 3, kind: input, shape index: {}]
  %s4 = inlined_call_operand.hbm [shape: bf16[16,128], index: 4, kind: input, shape index: {}]
  %s5 = inlined_call_operand.vmem [shape: bf16[8,128], index: 5, kind: output, shape index: {0}]
  %s6 = inlined_call_operand.vmem [shape: f32[8,16], index: 6, kind: output, shape index: {1}]
  %7 = xla_tuple %s5, %s6
  %s8 = sld [smem:[#allocation0]]
  $region62: #{deepseekv3_moe_forward.2} parent=0
    _
  %s10 = ssub.s32 1, %s8
  %s11 = scalar_select 0, %s10, %s8
  $region1: #{deepseekv3_moe_forward.2} parent=0
    #allocation3 [shape = 'u8[32768]{0}', space=vmem, size = 0x8000, scoped, tag = 'input window, operand 1, single buffered']
    #allocation4 [shape = 's32[1]{0}', space=sflag, size = 0x4, scoped, tag = 'scoped memory for deepseekv3_moe_forward.2']
    #allocation5 [shape = 'u8[32768]{0}', space=vmem, size = 0x8000, scoped, tag = 'input window, operand 2, single buffered']
    #allocation6 [shape = 's32[1]{0}', space=sflag, size = 0x4, scoped, tag = 'scoped memory for deepseekv3_moe_forward.2']
    #allocation7 [shape = 'u8[32768]{0}', space=vmem, size = 0x8000, scoped, tag = 'input window, operand 3, single buffered']
    #allocation8 [shape = 'u8[4096]{0}', space=vmem, size = 0x1000, scoped, tag = 'input window, operand 4, single buffered']
    #allocation9 [shape = 's32[1]{0}', space=sflag, size = 0x4, scoped, tag = 'scoped memory for deepseekv3_moe_forward.2']
    %12 = vsyncpa [#allocation4], 0
    %13 = vsyncpa [#allocation6], 0
    %14 = vsyncpa [#allocation9], 0
    // Predicated region
    $region2: #{deepseekv3_moe_forward.2} parent=1 // pred_check
      _
    $region3: #{deepseekv3_moe_forward.2} parent=1 // pred_check_branch
      %16 = sbr.rel (0) target = $region5
    $region4: #{deepseekv3_moe_forward.2} parent=1 // pred_region
      _
    $region5: #{deepseekv3_moe_forward.2} parent=1 // pred_fallthru
      _
    // Predicated region
    $region6: #{deepseekv3_moe_forward.2} parent=1 // pred_check
      _
    $region7: #{deepseekv3_moe_forward.2} parent=1 // pred_check_branch
      %18 = sbr.rel (0) target = $region9
    $region8: #{deepseekv3_moe_forward.2} parent=1 // pred_region
      %s20 = ssub.s32 1024, 1024
      %21 = vsyncadd [#allocation4], %s20
      %s22 = sshll.u32 [#allocation3], 4
      %s23 = int_to_ptr.vmem [resolvable:$true] %s22
      %28 = dma.hbm_to_vmem [thread:$0]  %s1, 1024, %s23, [#allocation4], 64, 64, 4
    $region9: #{deepseekv3_moe_forward.2} parent=1 // pred_fallthru
      _
    // Predicated region
    $region10: #{deepseekv3_moe_forward.2} parent=1 // pred_check
      _
    $region11: #{deepseekv3_moe_forward.2} parent=1 // pred_check_branch
      %30 = sbr.rel (0) target = $region13
    $region12: #{deepseekv3_moe_forward.2} parent=1 // pred_region
      %s32 = ssub.s32 1024, 1024
      %33 = vsyncadd [#allocation6], %s32
      %s34 = sshll.u32 [#allocation5], 4
      %s35 = int_to_ptr.vmem [resolvable:$true] %s34
      %40 = dma.hbm_to_vmem [thread:$0]  %s2, 1024, %s35, [#allocation6], 64, 64, 4
    $region13: #{deepseekv3_moe_forward.2} parent=1 // pred_fallthru
      _
    // Predicated region
    $region14: #{deepseekv3_moe_forward.2} parent=1 // pred_check
      _
    $region15: #{deepseekv3_moe_forward.2} parent=1 // pred_check_branch
      %42 = sbr.rel (0) target = $region17
    $region16: #{deepseekv3_moe_forward.2} parent=1 // pred_region
      %s44 = ssub.s32 1024, 1024
      %45 = vsyncadd [#allocation6], %s44
      %s46 = sshll.u32 [#allocation7], 4
      %s47 = int_to_ptr.vmem [resolvable:$true] %s46
      %52 = dma.hbm_to_vmem [thread:$0]  %s3, 1024, %s47, [#allocation6], 64, 64, 4
    $region17: #{deepseekv3_moe_forward.2} parent=1 // pred_fallthru
      _
    // Predicated region
    $region18: #{deepseekv3_moe_forward.2} parent=1 // pred_check
      _
    $region19: #{deepseekv3_moe_forward.2} parent=1 // pred_check_branch
      %54 = sbr.rel (0) target = $region21
    $region20: #{deepseekv3_moe_forward.2} parent=1 // pred_region
      %s56 = ssub.s32 128, 128
      %57 = vsyncadd [#allocation9], %s56
      %s58 = sshll.u32 [#allocation8], 4
      %s59 = int_to_ptr.vmem [resolvable:$true] %s58
      %64 = dma.hbm_to_vmem [thread:$0]  %s4, 128, %s59, [#allocation9], 64, 64, 4
    $region21: #{deepseekv3_moe_forward.2} parent=1 // pred_fallthru
      _
    // Predicated region
    $region22: #{deepseekv3_moe_forward.2} parent=1 // pred_check
      _
    $region23: #{deepseekv3_moe_forward.2} parent=1 // pred_check_branch
      %66 = sbr.rel (0) target = $region25
    $region24: #{deepseekv3_moe_forward.2} parent=1 // pred_region
      %67 = dma.done [#allocation4], 1024
    $region25: #{deepseekv3_moe_forward.2} parent=1 // pred_fallthru
      _
    // Predicated region
    $region26: #{deepseekv3_moe_forward.2} parent=1 // pred_check
      _
    $region27: #{deepseekv3_moe_forward.2} parent=1 // pred_check_branch
      %69 = sbr.rel (0) target = $region29
    $region28: #{deepseekv3_moe_forward.2} parent=1 // pred_region
      %70 = dma.done [#allocation6], 1024
    $region29: #{deepseekv3_moe_forward.2} parent=1 // pred_fallthru
      _
    // Predicated region
    $region30: #{deepseekv3_moe_forward.2} parent=1 // pred_check
      _
    $region31: #{deepseekv3_moe_forward.2} parent=1 // pred_check_branch
      %72 = sbr.rel (0) target = $region33
    $region32: #{deepseekv3_moe_forward.2} parent=1 // pred_region
      %73 = dma.done [#allocation6], 1024
    $region33: #{deepseekv3_moe_forward.2} parent=1 // pred_fallthru
      _
    // Predicated region
    $region34: #{deepseekv3_moe_forward.2} parent=1 // pred_check
      _
    $region35: #{deepseekv3_moe_forward.2} parent=1 // pred_check_branch
      %75 = sbr.rel (0) target = $region37
    $region36: #{deepseekv3_moe_forward.2} parent=1 // pred_region
      %76 = dma.done [#allocation9], 128
    $region37: #{deepseekv3_moe_forward.2} parent=1 // pred_fallthru
      _
    %v78 = vld [vmem:[%s0] sm:$0xf]
    %p79 = scmp.eq.s32.totalorder 0, 0
    // Predicated region
    $region38: #{deepseekv3_moe_forward.2} parent=1 // pred_check
      %p80 = pneg %p79
    $region39: #{deepseekv3_moe_forward.2} parent=1 // pred_check_branch
      %82 = sbr.rel (%p80) target = $region41
    $region40: #{deepseekv3_moe_forward.2} parent=1 // pred_region
      %83 = vst [vmem:[#allocation2] sm:$0xff] 0.0
      %v84 = vld [vmem:[#allocation8] sm:$0xf]
      %v85 = vld [vmem:[#allocation8 + $0x4] sm:$0xf]
      %v88 = vunpack.c.l.b16 %v84
      %v89 = vunpack.c.l.b16 %v85
      %v90 = vpack.c.b16 %v89, %v88
      %92 = vmatprep.subr.bf16.mxu0 0
      %93 = vmatpush1.bf16.xpose.msra.mxu0 %v90
      %94 = vmatprep.subr.bf16.mxu0 0
      %95 = vmatpush1.bf16.xpose.msra.mxu0 0
      %96 = vmatprep.subr.bf16.mxu0 0
      %97 = vmatpush1.bf16.xpose.msra.mxu0 0
      %98 = vmatprep.subr.bf16.mxu0 0
      %99 = vmatpush1.bf16.xpose.msra.mxu0 0
      %100 = vmatprep.subr.bf16.mxu0 0
      %101 = vmatpush1.bf16.xpose.msra.mxu0 0
      %102 = vmatprep.subr.bf16.mxu0 0
      %103 = vmatpush1.bf16.xpose.msra.mxu0 0
      %104 = vmatprep.subr.bf16.mxu0 0
      %105 = vmatpush1.bf16.xpose.msra.mxu0 0
      %106 = vmatprep.subr.bf16.mxu0 0
      %107 = vmatpush1.bf16.xpose.msra.mxu0 0
      %108 = vmatprep.subr.bf16.mxu0 0
      %109 = vmatpush1.bf16.xpose.msra.mxu0 0
      %110 = vmatprep.subr.bf16.mxu0 0
      %111 = vmatpush1.bf16.xpose.msra.mxu0 0
      %112 = vmatprep.subr.bf16.mxu0 0
      %113 = vmatpush1.bf16.xpose.msra.mxu0 0
      %114 = vmatprep.subr.bf16.mxu0 0
      %115 = vmatpush1.bf16.xpose.msra.mxu0 0
      %116 = vmatprep.subr.bf16.mxu0 0
      %117 = vmatpush1.bf16.xpose.msra.mxu0 0
      %118 = vmatprep.subr.bf16.mxu0 0
      %119 = vmatpush1.bf16.xpose.msra.mxu0 0
      %120 = vmatprep.subr.bf16.mxu0 0
      %121 = vmatpush1.bf16.xpose.msra.mxu0 0
      %122 = vmatprep.subr.bf16.mxu0 0
      %123 = vmatpush1.bf16.xpose.msra.mxu0 0
      %124 = vmatprep.mubr.bf16.mxu0 0
      %125 = vmatmul.mubr.bf16.gmra.mrb[0].mxu0 %v78
      %v126 = vpop.f32.mrb[0].mxu0
      %v127 = vadd.f32 0.0, %v126
      %v128 = vpop.f32.mrb[0].mxu0
      %v129 = vpop.f32.mrb[0].mxu0
      %v130 = vpop.f32.mrb[0].mxu0
      %131 = vdwg.mxu0
      %vm132 = vcmask 130048
      %133 = vst.msk [vmem:[%s6] sm:$0xff] %vm132, %v127
    $region41: #{deepseekv3_moe_forward.2} parent=1 // pred_fallthru
      _
    %v134 = vld [vmem:[#allocation3] sm:$0xf]
    %v135 = vld [vmem:[#allocation3 + $0x4] sm:$0xf]
    %v136 = vld [vmem:[#allocation3 + $0x8] sm:$0xf]
    %v137 = vld [vmem:[#allocation3 + $0xc] sm:$0xf]
    %v138 = vld [vmem:[#allocation3 + $0x10] sm:$0xf]
    %v139 = vld [vmem:[#allocation3 + $0x14] sm:$0xf]
    %v140 = vld [vmem:[#allocation3 + $0x18] sm:$0xf]
    %v141 = vld [vmem:[#allocation3 + $0x1c] sm:$0xf]
    %v142 = vld [vmem:[#allocation3 + $0x20] sm:$0xf]
    %v143 = vld [vmem:[#allocation3 + $0x24] sm:$0xf]
    %v144 = vld [vmem:[#allocation3 + $0x28] sm:$0xf]
    %v145 = vld [vmem:[#allocation3 + $0x2c] sm:$0xf]
    %v146 = vld [vmem:[#allocation3 + $0x30] sm:$0xf]
    %v147 = vld [vmem:[#allocation3 + $0x34] sm:$0xf]
    %v148 = vld [vmem:[#allocation3 + $0x38] sm:$0xf]
    %v149 = vld [vmem:[#allocation3 + $0x3c] sm:$0xf]
    %v166 = vunpack.c.l.b16 %v134
    %v167 = vunpack.c.l.b16 %v135
    %v168 = vunpack.c.l.b16 %v136
    %v169 = vunpack.c.l.b16 %v137
    %v170 = vunpack.c.l.b16 %v138
    %v171 = vunpack.c.l.b16 %v139
    %v172 = vunpack.c.l.b16 %v140
    %v173 = vunpack.c.l.b16 %v141
    %v174 = vunpack.c.l.b16 %v142
    %v175 = vunpack.c.l.b16 %v143
    %v176 = vunpack.c.l.b16 %v144
    %v177 = vunpack.c.l.b16 %v145
    %v178 = vunpack.c.l.b16 %v146
    %v179 = vunpack.c.l.b16 %v147
    %v180 = vunpack.c.l.b16 %v148
    %v181 = vunpack.c.l.b16 %v149
    %v182 = vpack.c.b16 %v167, %v166
    %v183 = vpack.c.b16 %v169, %v168
    %v184 = vpack.c.b16 %v171, %v170
    %v185 = vpack.c.b16 %v173, %v172
    %v186 = vpack.c.b16 %v175, %v174
    %v187 = vpack.c.b16 %v177, %v176
    %v188 = vpack.c.b16 %v179, %v178
    %v189 = vpack.c.b16 %v181, %v180
    %198 = vmatprep.subr.bf16.mxu0 0
    %199 = vmatpush1.bf16.xpose.msra.mxu0 %v182
    %200 = vmatprep.subr.bf16.mxu0 0
    %201 = vmatpush1.bf16.xpose.msra.mxu0 %v183
    %202 = vmatprep.subr.bf16.mxu0 0
    %203 = vmatpush1.bf16.xpose.msra.mxu0 %v184
    %204 = vmatprep.subr.bf16.mxu0 0
    %205 = vmatpush1.bf16.xpose.msra.mxu0 %v185
    %206 = vmatprep.subr.bf16.mxu0 0
    %207 = vmatpush1.bf16.xpose.msra.mxu0 %v186
    %208 = vmatprep.subr.bf16.mxu0 0
    %209 = vmatpush1.bf16.xpose.msra.mxu0 %v187
    %210 = vmatprep.subr.bf16.mxu0 0
    %211 = vmatpush1.bf16.xpose.msra.mxu0 %v188
    %212 = vmatprep.subr.bf16.mxu0 0
    %213 = vmatpush1.bf16.xpose.msra.mxu0 %v189
    %214 = vmatprep.subr.bf16.mxu0 0
    %215 = vmatpush1.bf16.xpose.msra.mxu0 0
    %216 = vmatprep.subr.bf16.mxu0 0
    %217 = vmatpush1.bf16.xpose.msra.mxu0 0
    %218 = vmatprep.subr.bf16.mxu0 0
    %219 = vmatpush1.bf16.xpose.msra.mxu0 0
    %220 = vmatprep.subr.bf16.mxu0 0
    %221 = vmatpush1.bf16.xpose.msra.mxu0 0
    %222 = vmatprep.subr.bf16.mxu0 0
    %223 = vmatpush1.bf16.xpose.msra.mxu0 0
    %224 = vmatprep.subr.bf16.mxu0 0
    %225 = vmatpush1.bf16.xpose.msra.mxu0 0
    %226 = vmatprep.subr.bf16.mxu0 0
    %227 = vmatpush1.bf16.xpose.msra.mxu0 0
    %228 = vmatprep.subr.bf16.mxu0 0
    %229 = vmatpush1.bf16.xpose.msra.mxu0 0
    %230 = vmatprep.mubr.bf16.mxu0 0
    %231 = vmatmul.mubr.bf16.gmra.mrb[0].mxu0 %v78
    %v232 = vpop.f32.mrb[0].mxu0
    %v233 = vadd.f32 0.0, %v232
    %v234 = vpop.f32.mrb[0].mxu0
    %v235 = vpop.f32.mrb[0].mxu0
    %v236 = vpop.f32.mrb[0].mxu0
    %237 = vdwg.mxu0
    %v238 = vld [vmem:[#allocation5] sm:$0xf]
    %v239 = vld [vmem:[#allocation5 + $0x4] sm:$0xf]
    %v240 = vld [vmem:[#allocation5 + $0x8] sm:$0xf]
    %v241 = vld [vmem:[#allocation5 + $0xc] sm:$0xf]
    %v242 = vld [vmem:[#allocation5 + $0x10] sm:$0xf]
    %v243 = vld [vmem:[#allocation5 + $0x14] sm:$0xf]
    %v244 = vld [vmem:[#allocation5 + $0x18] sm:$0xf]
    %v245 = vld [vmem:[#allocation5 + $0x1c] sm:$0xf]
    %v246 = vld [vmem:[#allocation5 + $0x20] sm:$0xf]
    %v247 = vld [vmem:[#allocation5 + $0x24] sm:$0xf]
    %v248 = vld [vmem:[#allocation5 + $0x28] sm:$0xf]
    %v249 = vld [vmem:[#allocation5 + $0x2c] sm:$0xf]
    %v250 = vld [vmem:[#allocation5 + $0x30] sm:$0xf]
    %v251 = vld [vmem:[#allocation5 + $0x34] sm:$0xf]
    %v252 = vld [vmem:[#allocation5 + $0x38] sm:$0xf]
    %v253 = vld [vmem:[#allocation5 + $0x3c] sm:$0xf]
    %v270 = vunpack.c.l.b16 %v238
    %v271 = vunpack.c.l.b16 %v239
    %v272 = vunpack.c.l.b16 %v240
    %v273 = vunpack.c.l.b16 %v241
    %v274 = vunpack.c.l.b16 %v242
    %v275 = vunpack.c.l.b16 %v243
    %v276 = vunpack.c.l.b16 %v244
    %v277 = vunpack.c.l.b16 %v245
    %v278 = vunpack.c.l.b16 %v246
    %v279 = vunpack.c.l.b16 %v247
    %v280 = vunpack.c.l.b16 %v248
    %v281 = vunpack.c.l.b16 %v249
    %v282 = vunpack.c.l.b16 %v250
    %v283 = vunpack.c.l.b16 %v251
    %v284 = vunpack.c.l.b16 %v252
    %v285 = vunpack.c.l.b16 %v253
    %v286 = vpack.c.b16 %v271, %v270
    %v287 = vpack.c.b16 %v273, %v272
    %v288 = vpack.c.b16 %v275, %v274
    %v289 = vpack.c.b16 %v277, %v276
    %v290 = vpack.c.b16 %v279, %v278
    %v291 = vpack.c.b16 %v281, %v280
    %v292 = vpack.c.b16 %v283, %v282
    %v293 = vpack.c.b16 %v285, %v284
    %302 = vmatprep.subr.bf16.mxu0 0
    %303 = vmatpush1.bf16.xpose.msra.mxu0 %v286
    %304 = vmatprep.subr.bf16.mxu0 0
    %305 = vmatpush1.bf16.xpose.msra.mxu0 %v287
    %306 = vmatprep.subr.bf16.mxu0 0
    %307 = vmatpush1.bf16.xpose.msra.mxu0 %v288
    %308 = vmatprep.subr.bf16.mxu0 0
    %309 = vmatpush1.bf16.xpose.msra.mxu0 %v289
    %310 = vmatprep.subr.bf16.mxu0 0
    %311 = vmatpush1.bf16.xpose.msra.mxu0 %v290
    %312 = vmatprep.subr.bf16.mxu0 0
    %313 = vmatpush1.bf16.xpose.msra.mxu0 %v291
    %314 = vmatprep.subr.bf16.mxu0 0
    %315 = vmatpush1.bf16.xpose.msra.mxu0 %v292
    %316 = vmatprep.subr.bf16.mxu0 0
    %317 = vmatpush1.bf16.xpose.msra.mxu0 %v293
    %318 = vmatprep.subr.bf16.mxu0 0
    %319 = vmatpush1.bf16.xpose.msra.mxu0 0
    %320 = vmatprep.subr.bf16.mxu0 0
    %321 = vmatpush1.bf16.xpose.msra.mxu0 0
    %322 = vmatprep.subr.bf16.mxu0 0
    %323 = vmatpush1.bf16.xpose.msra.mxu0 0
    %324 = vmatprep.subr.bf16.mxu0 0
    %325 = vmatpush1.bf16.xpose.msra.mxu0 0
    %326 = vmatprep.subr.bf16.mxu0 0
    %327 = vmatpush1.bf16.xpose.msra.mxu0 0
    %328 = vmatprep.subr.bf16.mxu0 0
    %329 = vmatpush1.bf16.xpose.msra.mxu0 0
    %330 = vmatprep.subr.bf16.mxu0 0
    %331 = vmatpush1.bf16.xpose.msra.mxu0 0
    %332 = vmatprep.subr.bf16.mxu0 0
    %333 = vmatpush1.bf16.xpose.msra.mxu0 0
    %334 = vmatprep.mubr.bf16.mxu0 0
    %335 = vmatmul.mubr.bf16.gmra.mrb[0].mxu0 %v78
    %v336 = vpop.f32.mrb[0].mxu0
    %v337 = vadd.f32 0.0, %v336
    %v338 = vpop.f32.mrb[0].mxu0
    %v339 = vpop.f32.mrb[0].mxu0
    %v340 = vpop.f32.mrb[0].mxu0
    %341 = vdwg.mxu0
    %v342 = vxor.u32 %v233, 2147483648
    %v343 = vmul.f32 %v342, 1.442695
    %v344 = vpow.pop %v343
    %v345 = vadd.f32 %v344, 1.0
    %v346 = vrcp.pop %v345
    %v347 = vmul.f32 1.0, %v346
    %v348 = vmul.f32 %v233, %v347
    %v349 = vmul.f32 %v348, %v337
    %v350 = vld [vmem:[#allocation2] sm:$0xff]
    %v351 = vpack.c.bf16 %v349, %v349
    %v352 = vld [vmem:[#allocation7] sm:$0xf]
    %v353 = vld [vmem:[#allocation7 + $0x4] sm:$0xf]
    %v354 = vld [vmem:[#allocation7 + $0x8] sm:$0xf]
    %v355 = vld [vmem:[#allocation7 + $0xc] sm:$0xf]
    %v356 = vld [vmem:[#allocation7 + $0x10] sm:$0xf]
    %v357 = vld [vmem:[#allocation7 + $0x14] sm:$0xf]
    %v358 = vld [vmem:[#allocation7 + $0x18] sm:$0xf]
    %v359 = vld [vmem:[#allocation7 + $0x1c] sm:$0xf]
    %v360 = vld [vmem:[#allocation7 + $0x20] sm:$0xf]
    %v361 = vld [vmem:[#allocation7 + $0x24] sm:$0xf]
    %v362 = vld [vmem:[#allocation7 + $0x28] sm:$0xf]
    %v363 = vld [vmem:[#allocation7 + $0x2c] sm:$0xf]
    %v364 = vld [vmem:[#allocation7 + $0x30] sm:$0xf]
    %v365 = vld [vmem:[#allocation7 + $0x34] sm:$0xf]
    %v366 = vld [vmem:[#allocation7 + $0x38] sm:$0xf]
    %v367 = vld [vmem:[#allocation7 + $0x3c] sm:$0xf]
    %v384 = vunpack.c.l.b16 %v352
    %v385 = vunpack.c.l.b16 %v353
    %v386 = vunpack.c.l.b16 %v354
    %v387 = vunpack.c.l.b16 %v355
    %v388 = vunpack.c.l.b16 %v356
    %v389 = vunpack.c.l.b16 %v357
    %v390 = vunpack.c.l.b16 %v358
    %v391 = vunpack.c.l.b16 %v359
    %v392 = vunpack.c.l.b16 %v360
    %v393 = vunpack.c.l.b16 %v361
    %v394 = vunpack.c.l.b16 %v362
    %v395 = vunpack.c.l.b16 %v363
    %v396 = vunpack.c.l.b16 %v364
    %v397 = vunpack.c.l.b16 %v365
    %v398 = vunpack.c.l.b16 %v366
    %v399 = vunpack.c.l.b16 %v367
    %v400 = vpack.c.b16 %v385, %v384
    %v401 = vpack.c.b16 %v387, %v386
    %v402 = vpack.c.b16 %v389, %v388
    %v403 = vpack.c.b16 %v391, %v390
    %v404 = vpack.c.b16 %v393, %v392
    %v405 = vpack.c.b16 %v395, %v394
    %v406 = vpack.c.b16 %v397, %v396
    %v407 = vpack.c.b16 %v399, %v398
    %416 = vmatprep.subr.bf16.mxu0 0
    %417 = vmatpush1.bf16.xpose.msra.mxu0 %v400
    %418 = vmatprep.subr.bf16.mxu0 0
    %419 = vmatpush1.bf16.xpose.msra.mxu0 %v401
    %420 = vmatprep.subr.bf16.mxu0 0
    %421 = vmatpush1.bf16.xpose.msra.mxu0 %v402
    %422 = vmatprep.subr.bf16.mxu0 0
    %423 = vmatpush1.bf16.xpose.msra.mxu0 %v403
    %424 = vmatprep.subr.bf16.mxu0 0
    %425 = vmatpush1.bf16.xpose.msra.mxu0 %v404
    %426 = vmatprep.subr.bf16.mxu0 0
    %427 = vmatpush1.bf16.xpose.msra.mxu0 %v405
    %428 = vmatprep.subr.bf16.mxu0 0
    %429 = vmatpush1.bf16.xpose.msra.mxu0 %v406
    %430 = vmatprep.subr.bf16.mxu0 0
    %431 = vmatpush1.bf16.xpose.msra.mxu0 %v407
    %432 = vmatprep.subr.bf16.mxu0 0
    %433 = vmatpush1.bf16.xpose.msra.mxu0 0
    %434 = vmatprep.subr.bf16.mxu0 0
    %435 = vmatpush1.bf16.xpose.msra.mxu0 0
    %436 = vmatprep.subr.bf16.mxu0 0
    %437 = vmatpush1.bf16.xpose.msra.mxu0 0
    %438 = vmatprep.subr.bf16.mxu0 0
    %439 = vmatpush1.bf16.xpose.msra.mxu0 0
    %440 = vmatprep.subr.bf16.mxu0 0
    %441 = vmatpush1.bf16.xpose.msra.mxu0 0
    %442 = vmatprep.subr.bf16.mxu0 0
    %443 = vmatpush1.bf16.xpose.msra.mxu0 0
    %444 = vmatprep.subr.bf16.mxu0 0
    %445 = vmatpush1.bf16.xpose.msra.mxu0 0
    %446 = vmatprep.subr.bf16.mxu0 0
    %447 = vmatpush1.bf16.xpose.msra.mxu0 0
    %448 = vmatprep.mubr.bf16.mxu0 0
    %449 = vmatmul.mubr.bf16.gmra.mrb[0].mxu0 %v351
    %v450 = vpop.f32.mrb[0].mxu0
    %v451 = vadd.f32 0.0, %v450
    %v452 = vpop.f32.mrb[0].mxu0
    %v453 = vpop.f32.mrb[0].mxu0
    %v454 = vpop.f32.mrb[0].mxu0
    %455 = vdwg.mxu0
    %v456 = vadd.f32 %v350, %v451
    %457 = vst [vmem:[#allocation2] sm:$0xff] %v456
    // Predicated region
    $region42: #{deepseekv3_moe_forward.2} parent=1 // pred_check
      %p458 = pneg %p79
    $region43: #{deepseekv3_moe_forward.2} parent=1 // pred_check_branch
      %460 = sbr.rel (%p458) target = $region45
    $region44: #{deepseekv3_moe_forward.2} parent=1 // pred_region
      %v461 = vld [vmem:[#allocation2] sm:$0xff]
      %v462 = vpack.c.bf16 %v461, %v461
      %463 = vst [vmem:[%s5] sm:$0xf] %v462
    $region45: #{deepseekv3_moe_forward.2} parent=1 // pred_fallthru
      _
    // Predicated region
    $region46: #{deepseekv3_moe_forward.2} parent=1 // pred_check
      _
    $region47: #{deepseekv3_moe_forward.2} parent=1 // pred_check_branch
      %465 = sbr.rel (0) target = $region49
    $region48: #{deepseekv3_moe_forward.2} parent=1 // pred_region
      _
    $region49: #{deepseekv3_moe_forward.2} parent=1 // pred_fallthru
      _
    // Predicated region
    $region50: #{deepseekv3_moe_forward.2} parent=1 // pred_check
      _
    $region51: #{deepseekv3_moe_forward.2} parent=1 // pred_check_branch
      %467 = sbr.rel (0) target = $region53
    $region52: #{deepseekv3_moe_forward.2} parent=1 // pred_region
      _
    $region53: #{deepseekv3_moe_forward.2} parent=1 // pred_fallthru
      _
    // Predicated region
    $region54: #{deepseekv3_moe_forward.2} parent=1 // pred_check
      _
    $region55: #{deepseekv3_moe_forward.2} parent=1 // pred_check_branch
      %469 = sbr.rel (0) target = $region57
    $region56: #{deepseekv3_moe_forward.2} parent=1 // pred_region
      _
    $region57: #{deepseekv3_moe_forward.2} parent=1 // pred_fallthru
      _
    // Predicated region
    $region58: #{deepseekv3_moe_forward.2} parent=1 // pred_check
      _
    $region59: #{deepseekv3_moe_forward.2} parent=1 // pred_check_branch
      %471 = sbr.rel (0) target = $region61
    $region60: #{deepseekv3_moe_forward.2} parent=1 // pred_region
      _
    $region61: #{deepseekv3_moe_forward.2} parent=1 // pred_fallthru
      _
    %472 = vsyncpa [#allocation4], 1
    %473 = vsyncpa [#allocation6], 1
    %474 = vsyncpa [#allocation9], 1

// kernel: deepseekv3_moe_forward.3
$region0: #{deepseekv3_moe_forward.3}
  #allocation0 [shape = 'u32[]', space=smem, size = 0x4, offset = 0x4, fixed_abs, tag = 'smem constant byte address 0x4 - core index']
  #allocation1 [shape = 'u32[144,128]{1,0:T(1,128)}', space=vmem, size = 0x12000, scoped, tag = 'internal scratch']
  #allocation2 [shape = 'f32[8,128]{1,0:T(8,128)}', space=vmem, size = 0x1000, scoped, tag = 'scratch operand']
  #allocation3 [shape = 's32[1]{0}', space=sflag, size = 0x4, scoped, tag = 'scoped memory for deepseekv3_moe_forward.3']
  #allocation4 [shape = 'u8[512]{0}', space=smem, size = 0x200, scoped, tag = 'prefetched SMEM operand 0']
  #allocation5 [shape = 's32[1]{0:T(128)S(6)}', space=smem, size = 0x200, scoped, tag = 'prefetched SMEM operand 1']
  %s0 = inlined_call_operand.vmem [shape: s32[16], index: 0, kind: input, shape index: {}]
  %s1 = inlined_call_operand.<no memory space> [shape: s32[1], index: 1, kind: input, shape index: {}]
  %s2 = inlined_call_operand.vmem [shape: bf16[8,128], index: 2, kind: input, shape index: {}]
  %s3 = inlined_call_operand.vmem [shape: bf16[16,64,128], index: 3, kind: input, shape index: {}]
  %s4 = inlined_call_operand.vmem [shape: bf16[16,64,128], index: 4, kind: input, shape index: {}]
  %s5 = inlined_call_operand.vmem [shape: bf16[16,128,64], index: 5, kind: input, shape index: {}]
  %s6 = inlined_call_operand.vmem [shape: f32[16,8,1], index: 6, kind: input, shape index: {}]
  %s7 = inlined_call_operand.vmem [shape: bf16[8,128], index: 7, kind: input, shape index: {}]
  %s8 = inlined_call_operand.hbm [shape: bf16[8,128], index: 8, kind: output, shape index: {}]
  %s9 = sld [smem:[#allocation0]]
  $region69: #{deepseekv3_moe_forward.3} parent=0
    _
  %s11 = ssub.s32 1, %s9
  %s12 = scalar_select 0, %s11, %s9
  %s13 = sshll.u32 %s0, 4
  %s14 = int_to_ptr.vmem [resolvable:$true] %s13
  %16 = dma.vmem_to_smem %s14, 16, [#allocation4], [#allocation3]
  %17 = sst [smem:[#allocation5]] %s1
  %18 = dma.done [#allocation3], 16
  %19 = sfence
  $region1: #{deepseekv3_moe_forward.3} parent=0
    #allocation6 [shape = 'u8[2048]{0}', space=vmem, size = 0x800, scoped, tag = 'output window, operand 0, single buffered']
    #allocation7 [shape = 's32[2]{0}', space=sflag, size = 0x8, scoped, tag = 'scoped memory for deepseekv3_moe_forward.3']
    %20 = vsyncpa [#allocation7], 0
    loop: start=0, step=1, limit=18
    $region2: #{deepseekv3_moe_forward.3} parent=1 // loop_pre_header
      _
    $region3: #{deepseekv3_moe_forward.3} parent=1 // loop_header
      %s22 = sphi 0, %s26
      %p23 = scmp.ge.s32.totalorder %s22, 18
      %s29 = sphi 0, %s48
      %s30 = sphi 0, %s44
      %s31 = sphi 0, %s40
      %s32 = sphi 0, %s29
      %s33 = sphi 0, %s30
      %s34 = sphi 0, %s31
      %s35 = sphi 0, %s32
      %s36 = sphi 0, %s33
      %s37 = sphi 0, %s34
      %s51 = sphi 0, %s53
      %s54 = sphi 0, %s51
      %s55 = sphi 0, %s54
      %s71 = sphi 0, %s55
      %s93 = sphi 0, %s95
      %s96 = sphi 0, %s93
      %s97 = sphi 0, %s96
      %s113 = sphi 0, %s97
      %s135 = sphi 0, %s137
      %s138 = sphi 0, %s135
      %s139 = sphi 0, %s138
      %s155 = sphi 0, %s139
      %s177 = sphi 0, %s179
      %s180 = sphi 0, %s177
      %s181 = sphi 0, %s180
      %s197 = sphi 0, %s181
      %s205 = sphi 0, %s207
      %s208 = sphi 0, %s205
      %s209 = sphi 0, %s208
      %s225 = sphi 0, %s209
      %s231 = sphi 0, %s233
      %s234 = sphi 0, %s231
      %s235 = sphi 0, %s234
      %s251 = sphi 0, %s235
      %s257 = sphi 0, %s259
      %s260 = sphi 0, %s257
      %s261 = sphi 0, %s260
      %s277 = sphi 0, %s261
    $region4: #{deepseekv3_moe_forward.3} parent=1 // loop_header_branch
      %25 = sbr.rel (%p23) target = $region8
    $region5: #{deepseekv3_moe_forward.3} parent=1 // loop_body
      %s27 = ssub.s32 %s22, 1
      %s28 = ssub.s32 %s22, 2
      %s38 = sadd.s32 1, %s31
      %p39 = scmp.ge.s32.totalorder %s38, 1
      %s40 = scalar_select %p39, 0, %s38
      %s41 = sadd.s32 1, %s30
      %s42 = scalar_select %p39, %s41, %s30
      %p43 = scmp.ge.s32.totalorder %s42, 16
      %s44 = scalar_select %p43, 0, %s42
      %s45 = sadd.s32 1, %s29
      %s46 = scalar_select %p43, %s45, %s29
      %p47 = scmp.ge.s32.totalorder %s46, 1
      %s48 = scalar_select %p47, 0, %s46
      %s49 = ssub.s32 %s29, %s48
      %p50 = scmp.eq.s32.totalorder %s49, 0
      %s52 = sadd.s32 %s51, 1
      %s53 = scalar_select %p50, %s51, %s52
      %p56 = pneg %p50
      %p57 = scmp.eq.s32.totalorder %s22, 15
      %p58 = por %p56, %p57
      %p59 = scmp.ne.s32.totalorder %s51, %s54
      %p60 = scmp.eq.s32.totalorder %s22, 0
      %p61 = por %p59, %p60
      %p62 = scmp.ne.s32.totalorder %s51, %s54
      %p63 = scmp.eq.s32.totalorder %s27, 15
      %p64 = por %p62, %p63
      %p65 = scmp.ne.s32.totalorder %s54, %s55
      %p66 = scmp.eq.s32.totalorder %s27, 0
      %p67 = por %p65, %p66
      %p68 = scmp.ne.s32.totalorder %s54, %s55
      %p69 = scmp.eq.s32.totalorder %s28, 15
      %p70 = por %p68, %p69
      %p72 = scmp.ne.s32.totalorder %s55, %s71
      %p73 = scmp.eq.s32.totalorder %s28, 0
      %p74 = por %p72, %p73
      %s75 = sld [smem:[#allocation4 + %s30]]
      %s76 = sld [smem:[#allocation5]]
      %p77 = scmp.ge.s32.totalorder %s30, %s76
      %s78 = scalar_select %p77, 1, 0
      %s79 = ssub.s32 0, %s31
      %s80 = smul.u32 %s78, %s79
      %s81 = sadd.s32 %s31, %s80
      %s82 = sld [smem:[#allocation4 + %s44]]
      %s83 = sld [smem:[#allocation5]]
      %p84 = scmp.ge.s32.totalorder %s44, %s83
      %s85 = scalar_select %p84, 1, 0
      %s86 = ssub.s32 0, %s40
      %s87 = smul.u32 %s85, %s86
      %s88 = sadd.s32 %s40, %s87
      %s89 = ssub.s32 %s75, %s82
      %s90 = ssub.s32 %s81, %s88
      %s91 = sor.u32 %s89, %s90
      %p92 = scmp.eq.s32.totalorder %s91, 0
      %s94 = sadd.s32 %s93, 1
      %s95 = scalar_select %p92, %s93, %s94
      %p98 = pneg %p92
      %p99 = scmp.eq.s32.totalorder %s22, 15
      %p100 = por %p98, %p99
      %p101 = scmp.ne.s32.totalorder %s93, %s96
      %p102 = scmp.eq.s32.totalorder %s22, 0
      %p103 = por %p101, %p102
      %p104 = scmp.ne.s32.totalorder %s93, %s96
      %p105 = scmp.eq.s32.totalorder %s27, 15
      %p106 = por %p104, %p105
      %p107 = scmp.ne.s32.totalorder %s96, %s97
      %p108 = scmp.eq.s32.totalorder %s27, 0
      %p109 = por %p107, %p108
      %p110 = scmp.ne.s32.totalorder %s96, %s97
      %p111 = scmp.eq.s32.totalorder %s28, 15
      %p112 = por %p110, %p111
      %p114 = scmp.ne.s32.totalorder %s97, %s113
      %p115 = scmp.eq.s32.totalorder %s28, 0
      %p116 = por %p114, %p115
      %s117 = sld [smem:[#allocation4 + %s30]]
      %s118 = sld [smem:[#allocation5]]
      %p119 = scmp.ge.s32.totalorder %s30, %s118
      %s120 = scalar_select %p119, 1, 0
      %s121 = ssub.s32 0, %s31
      %s122 = smul.u32 %s120, %s121
      %s123 = sadd.s32 %s31, %s122
      %s124 = sld [smem:[#allocation4 + %s44]]
      %s125 = sld [smem:[#allocation5]]
      %p126 = scmp.ge.s32.totalorder %s44, %s125
      %s127 = scalar_select %p126, 1, 0
      %s128 = ssub.s32 0, %s40
      %s129 = smul.u32 %s127, %s128
      %s130 = sadd.s32 %s40, %s129
      %s131 = ssub.s32 %s117, %s124
      %s132 = ssub.s32 %s123, %s130
      %s133 = sor.u32 %s131, %s132
      %p134 = scmp.eq.s32.totalorder %s133, 0
      %s136 = sadd.s32 %s135, 1
      %s137 = scalar_select %p134, %s135, %s136
      %p140 = pneg %p134
      %p141 = scmp.eq.s32.totalorder %s22, 15
      %p142 = por %p140, %p141
      %p143 = scmp.ne.s32.totalorder %s135, %s138
      %p144 = scmp.eq.s32.totalorder %s22, 0
      %p145 = por %p143, %p144
      %p146 = scmp.ne.s32.totalorder %s135, %s138
      %p147 = scmp.eq.s32.totalorder %s27, 15
      %p148 = por %p146, %p147
      %p149 = scmp.ne.s32.totalorder %s138, %s139
      %p150 = scmp.eq.s32.totalorder %s27, 0
      %p151 = por %p149, %p150
      %p152 = scmp.ne.s32.totalorder %s138, %s139
      %p153 = scmp.eq.s32.totalorder %s28, 15
      %p154 = por %p152, %p153
      %p156 = scmp.ne.s32.totalorder %s139, %s155
      %p157 = scmp.eq.s32.totalorder %s28, 0
      %p158 = por %p156, %p157
      %s159 = sld [smem:[#allocation4 + %s30]]
      %s160 = sld [smem:[#allocation5]]
      %p161 = scmp.ge.s32.totalorder %s30, %s160
      %s162 = scalar_select %p161, 1, 0
      %s163 = ssub.s32 0, %s31
      %s164 = smul.u32 %s162, %s163
      %s165 = sadd.s32 %s31, %s164
      %s166 = sld [smem:[#allocation4 + %s44]]
      %s167 = sld [smem:[#allocation5]]
      %p168 = scmp.ge.s32.totalorder %s44, %s167
      %s169 = scalar_select %p168, 1, 0
      %s170 = ssub.s32 0, %s40
      %s171 = smul.u32 %s169, %s170
      %s172 = sadd.s32 %s40, %s171
      %s173 = ssub.s32 %s159, %s166
      %s174 = ssub.s32 %s165, %s172
      %s175 = sor.u32 %s173, %s174
      %p176 = scmp.eq.s32.totalorder %s175, 0
      %s178 = sadd.s32 %s177, 1
      %s179 = scalar_select %p176, %s177, %s178
      %p182 = pneg %p176
      %p183 = scmp.eq.s32.totalorder %s22, 15
      %p184 = por %p182, %p183
      %p185 = scmp.ne.s32.totalorder %s177, %s180
      %p186 = scmp.eq.s32.totalorder %s22, 0
      %p187 = por %p185, %p186
      %p188 = scmp.ne.s32.totalorder %s177, %s180
      %p189 = scmp.eq.s32.totalorder %s27, 15
      %p190 = por %p188, %p189
      %p191 = scmp.ne.s32.totalorder %s180, %s181
      %p192 = scmp.eq.s32.totalorder %s27, 0
      %p193 = por %p191, %p192
      %p194 = scmp.ne.s32.totalorder %s180, %s181
      %p195 = scmp.eq.s32.totalorder %s28, 15
      %p196 = por %p194, %p195
      %p198 = scmp.ne.s32.totalorder %s181, %s197
      %p199 = scmp.eq.s32.totalorder %s28, 0
      %p200 = por %p198, %p199
      %s201 = ssub.s32 %s30, %s44
      %s202 = ssub.s32 %s29, %s48
      %s203 = sor.u32 %s201, %s202
      %p204 = scmp.eq.s32.totalorder %s203, 0
      %s206 = sadd.s32 %s205, 1
      %s207 = scalar_select %p204, %s205, %s206
      %p210 = pneg %p204
      %p211 = scmp.eq.s32.totalorder %s22, 15
      %p212 = por %p210, %p211
      %p213 = scmp.ne.s32.totalorder %s205, %s208
      %p214 = scmp.eq.s32.totalorder %s22, 0
      %p215 = por %p213, %p214
      %p216 = scmp.ne.s32.totalorder %s205, %s208
      %p217 = scmp.eq.s32.totalorder %s27, 15
      %p218 = por %p216, %p217
      %p219 = scmp.ne.s32.totalorder %s208, %s209
      %p220 = scmp.eq.s32.totalorder %s27, 0
      %p221 = por %p219, %p220
      %p222 = scmp.ne.s32.totalorder %s208, %s209
      %p223 = scmp.eq.s32.totalorder %s28, 15
      %p224 = por %p222, %p223
      %p226 = scmp.ne.s32.totalorder %s209, %s225
      %p227 = scmp.eq.s32.totalorder %s28, 0
      %p228 = por %p226, %p227
      %s229 = ssub.s32 %s29, %s48
      %p230 = scmp.eq.s32.totalorder %s229, 0
      %s232 = sadd.s32 %s231, 1
      %s233 = scalar_select %p230, %s231, %s232
      %p236 = pneg %p230
      %p237 = scmp.eq.s32.totalorder %s22, 15
      %p238 = por %p236, %p237
      %p239 = scmp.ne.s32.totalorder %s231, %s234
      %p240 = scmp.eq.s32.totalorder %s22, 0
      %p241 = por %p239, %p240
      %p242 = scmp.ne.s32.totalorder %s231, %s234
      %p243 = scmp.eq.s32.totalorder %s27, 15
      %p244 = por %p242, %p243
      %p245 = scmp.ne.s32.totalorder %s234, %s235
      %p246 = scmp.eq.s32.totalorder %s27, 0
      %p247 = por %p245, %p246
      %p248 = scmp.ne.s32.totalorder %s234, %s235
      %p249 = scmp.eq.s32.totalorder %s28, 15
      %p250 = por %p248, %p249
      %p252 = scmp.ne.s32.totalorder %s235, %s251
      %p253 = scmp.eq.s32.totalorder %s28, 0
      %p254 = por %p252, %p253
      %s255 = ssub.s32 %s29, %s48
      %p256 = scmp.eq.s32.totalorder %s255, 0
      %s258 = sadd.s32 %s257, 1
      %s259 = scalar_select %p256, %s257, %s258
      %p262 = pneg %p256
      %p263 = scmp.eq.s32.totalorder %s22, 15
      %p264 = por %p262, %p263
      %p265 = scmp.ne.s32.totalorder %s257, %s260
      %p266 = scmp.eq.s32.totalorder %s22, 0
      %p267 = por %p265, %p266
      %p268 = scmp.ne.s32.totalorder %s257, %s260
      %p269 = scmp.eq.s32.totalorder %s27, 15
      %p270 = por %p268, %p269
      %p271 = scmp.ne.s32.totalorder %s260, %s261
      %p272 = scmp.eq.s32.totalorder %s27, 0
      %p273 = por %p271, %p272
      %p274 = scmp.ne.s32.totalorder %s260, %s261
      %p275 = scmp.eq.s32.totalorder %s28, 15
      %p276 = por %p274, %p275
      %p278 = scmp.ne.s32.totalorder %s261, %s277
      %p279 = scmp.eq.s32.totalorder %s28, 0
      %p280 = por %p278, %p279
      %p281 = scmp.le.s32.totalorder 1, %s22
      %p282 = scmp.lt.s32.totalorder %s22, 17
      %p283 = pnand %p281, %p282
      %p284 = pneg %p283
      // Predicated region
      $region9: #{deepseekv3_moe_forward.3} parent=5 // pred_check
        _
      $region10: #{deepseekv3_moe_forward.3} parent=5 // pred_check_branch
        %286 = sbr.rel (%p283) target = $region12
      $region11: #{deepseekv3_moe_forward.3} parent=5 // pred_region
        %s287 = ssub.s32 %s22, 1
        // Predicated region
        $region13: #{deepseekv3_moe_forward.3} parent=11 // pred_check
          %p288 = pneg %p67
        $region14: #{deepseekv3_moe_forward.3} parent=11 // pred_check_branch
          %290 = sbr.rel (%p288) target = $region16
        $region15: #{deepseekv3_moe_forward.3} parent=11 // pred_region
          %p291 = scmp.lt.s32.totalorder %s32, 0
          %s292 = scalar_select %p291, %s32, 0
          %s293 = smul.addr %s292, 4
          %s294 = scalar_lea.vmem %s2, %s293
        $region16: #{deepseekv3_moe_forward.3} parent=11 // pred_fallthru
          _
        // Predicated region
        $region17: #{deepseekv3_moe_forward.3} parent=11 // pred_check
          %p295 = pneg %p247
        $region18: #{deepseekv3_moe_forward.3} parent=11 // pred_check_branch
          %297 = sbr.rel (%p295) target = $region20
        $region19: #{deepseekv3_moe_forward.3} parent=11 // pred_region
          %p298 = scmp.lt.s32.totalorder %s32, 0
          %s299 = scalar_select %p298, %s32, 0
          %s300 = smul.addr %s299, 4
          %s301 = scalar_lea.vmem %s7, %s300
        $region20: #{deepseekv3_moe_forward.3} parent=11 // pred_fallthru
          _
      $region12: #{deepseekv3_moe_forward.3} parent=5 // pred_fallthru
        _
      %p302 = scmp.lt.s32.totalorder %s22, 16
      // Predicated region
      $region21: #{deepseekv3_moe_forward.3} parent=5 // pred_check
        %p303 = pneg %p302
      $region22: #{deepseekv3_moe_forward.3} parent=5 // pred_check_branch
        %305 = sbr.rel (%p303) target = $region24
      $region23: #{deepseekv3_moe_forward.3} parent=5 // pred_region
        // Predicated region
        $region25: #{deepseekv3_moe_forward.3} parent=23 // pred_check
          %p306 = pneg %p103
        $region26: #{deepseekv3_moe_forward.3} parent=23 // pred_check_branch
          %308 = sbr.rel (%p306) target = $region28
        $region27: #{deepseekv3_moe_forward.3} parent=23 // pred_region
          %s309 = sld [smem:[#allocation4 + %s30]]
          %s310 = sld [smem:[#allocation5]]
          %p311 = scmp.ge.s32.totalorder %s30, %s310
          %s312 = scalar_select %p311, 1, 0
          %s313 = ssub.s32 0, %s31
          %s314 = smul.u32 %s312, %s313
          %s315 = sadd.s32 %s31, %s314
          %s316 = smul.u32 8, %s315
          %p317 = scmp.lt.s32.totalorder %s309, 15
          %s318 = scalar_select %p317, %s309, 15
          %p319 = scmp.lt.s32.totalorder %s316, 7
          %s320 = scalar_select %p319, %s316, 7
          %s321 = smul.addr %s318, 8
          %s322 = sadd.s32 %s320, %s321
          %s323 = smul.addr %s322, 4
          %s324 = scalar_lea.vmem %s3, %s323
          %s325 = sld [smem:[#allocation4 + %s30]]
          %s326 = sld [smem:[#allocation5]]
          %p327 = scmp.ge.s32.totalorder %s30, %s326
          %s328 = scalar_select %p327, 1, 0
          %s329 = ssub.s32 0, %s31
          %s330 = smul.u32 %s328, %s329
          %s331 = sadd.s32 %s31, %s330
          %s332 = smul.u32 8, %s331
        $region28: #{deepseekv3_moe_forward.3} parent=23 // pred_fallthru
          _
        // Predicated region
        $region29: #{deepseekv3_moe_forward.3} parent=23 // pred_check
          %p333 = pneg %p145
        $region30: #{deepseekv3_moe_forward.3} parent=23 // pred_check_branch
          %335 = sbr.rel (%p333) target = $region32
        $region31: #{deepseekv3_moe_forward.3} parent=23 // pred_region
          %s336 = sld [smem:[#allocation4 + %s30]]
          %s337 = sld [smem:[#allocation5]]
          %p338 = scmp.ge.s32.totalorder %s30, %s337
          %s339 = scalar_select %p338, 1, 0
          %s340 = ssub.s32 0, %s31
          %s341 = smul.u32 %s339, %s340
          %s342 = sadd.s32 %s31, %s341
          %s343 = smul.u32 8, %s342
          %p344 = scmp.lt.s32.totalorder %s336, 15
          %s345 = scalar_select %p344, %s336, 15
          %p346 = scmp.lt.s32.totalorder %s343, 7
          %s347 = scalar_select %p346, %s343, 7
          %s348 = smul.addr %s345, 8
          %s349 = sadd.s32 %s347, %s348
          %s350 = smul.addr %s349, 4
          %s351 = scalar_lea.vmem %s4, %s350
          %s352 = sld [smem:[#allocation4 + %s30]]
          %s353 = sld [smem:[#allocation5]]
          %p354 = scmp.ge.s32.totalorder %s30, %s353
          %s355 = scalar_select %p354, 1, 0
          %s356 = ssub.s32 0, %s31
          %s357 = smul.u32 %s355, %s356
          %s358 = sadd.s32 %s31, %s357
          %s359 = smul.u32 8, %s358
        $region32: #{deepseekv3_moe_forward.3} parent=23 // pred_fallthru
          _
        // Predicated region
        $region33: #{deepseekv3_moe_forward.3} parent=23 // pred_check
          %p360 = pneg %p187
        $region34: #{deepseekv3_moe_forward.3} parent=23 // pred_check_branch
          %362 = sbr.rel (%p360) target = $region36
        $region35: #{deepseekv3_moe_forward.3} parent=23 // pred_region
          %s363 = sld [smem:[#allocation4 + %s30]]
          %s364 = sld [smem:[#allocation5]]
          %p365 = scmp.ge.s32.totalorder %s30, %s364
          %s366 = scalar_select %p365, 1, 0
          %s367 = ssub.s32 0, %s31
          %s368 = smul.u32 %s366, %s367
          %s369 = sadd.s32 %s31, %s368
          %p370 = scmp.lt.s32.totalorder %s363, 15
          %s371 = scalar_select %p370, %s363, 15
          %p372 = scmp.lt.s32.totalorder %s369, 0
          %s373 = scalar_select %p372, %s369, 0
          %s374 = smul.addr %s371, 16
          %s375 = sadd.s32 %s373, %s374
          %s376 = smul.addr %s375, 4
          %s377 = scalar_lea.vmem %s5, %s376
          %s378 = sld [smem:[#allocation4 + %s30]]
          %s379 = sld [smem:[#allocation5]]
          %p380 = scmp.ge.s32.totalorder %s30, %s379
          %s381 = scalar_select %p380, 1, 0
          %s382 = ssub.s32 0, %s31
          %s383 = smul.u32 %s381, %s382
          %s384 = sadd.s32 %s31, %s383
        $region36: #{deepseekv3_moe_forward.3} parent=23 // pred_fallthru
          _
        // Predicated region
        $region37: #{deepseekv3_moe_forward.3} parent=23 // pred_check
          %p385 = pneg %p215
        $region38: #{deepseekv3_moe_forward.3} parent=23 // pred_check_branch
          %387 = sbr.rel (%p385) target = $region40
        $region39: #{deepseekv3_moe_forward.3} parent=23 // pred_region
          %p388 = scmp.lt.s32.totalorder %s30, 15
          %s389 = scalar_select %p388, %s30, 15
          %p390 = scmp.lt.s32.totalorder %s29, 0
          %s391 = scalar_select %p390, %s29, 0
          %s392 = sadd.s32 %s391, %s389
          %s393 = smul.addr %s392, 8
          %s394 = scalar_lea.vmem %s6, %s393
        $region40: #{deepseekv3_moe_forward.3} parent=23 // pred_fallthru
          _
      $region24: #{deepseekv3_moe_forward.3} parent=5 // pred_fallthru
        _
      %p395 = scmp.le.s32.totalorder 1, %s22
      %p396 = scmp.lt.s32.totalorder %s22, 17
      %p397 = pnand %p395, %p396
      %p398 = pneg %p397
      // Predicated region
      $region41: #{deepseekv3_moe_forward.3} parent=5 // pred_check
        _
      $region42: #{deepseekv3_moe_forward.3} parent=5 // pred_check_branch
        %400 = sbr.rel (%p397) target = $region44
      $region43: #{deepseekv3_moe_forward.3} parent=5 // pred_region
        %s401 = ssub.s32 %s22, 1
        %p402 = scmp.lt.s32.totalorder %s32, 0
        %s403 = scalar_select %p402, %s32, 0
        %s404 = smul.addr %s403, 4
        %s405 = scalar_lea.vmem %s2, %s404
        %p406 = pneg %p67
        %p407 = pneg %p64
        %s408 = sld [smem:[#allocation4 + %s33]]
        %s409 = sld [smem:[#allocation5]]
        %p410 = scmp.ge.s32.totalorder %s33, %s409
        %s411 = scalar_select %p410, 1, 0
        %s412 = ssub.s32 0, %s34
        %s413 = smul.u32 %s411, %s412
        %s414 = sadd.s32 %s34, %s413
        %s415 = smul.u32 8, %s414
        %p416 = scmp.lt.s32.totalorder %s408, 15
        %s417 = scalar_select %p416, %s408, 15
        %p418 = scmp.lt.s32.totalorder %s415, 7
        %s419 = scalar_select %p418, %s415, 7
        %s420 = smul.addr %s417, 8
        %s421 = sadd.s32 %s419, %s420
        %s422 = smul.addr %s421, 4
        %s423 = scalar_lea.vmem %s3, %s422
        %p424 = pneg %p109
        %p425 = pneg %p106
        %s426 = sld [smem:[#allocation4 + %s33]]
        %s427 = sld [smem:[#allocation5]]
        %p428 = scmp.ge.s32.totalorder %s33, %s427
        %s429 = scalar_select %p428, 1, 0
        %s430 = ssub.s32 0, %s34
        %s431 = smul.u32 %s429, %s430
        %s432 = sadd.s32 %s34, %s431
        %s433 = smul.u32 8, %s432
        %p434 = scmp.lt.s32.totalorder %s426, 15
        %s435 = scalar_select %p434, %s426, 15
        %p436 = scmp.lt.s32.totalorder %s433, 7
        %s437 = scalar_select %p436, %s433, 7
        %s438 = smul.addr %s435, 8
        %s439 = sadd.s32 %s437, %s438
        %s440 = smul.addr %s439, 4
        %s441 = scalar_lea.vmem %s4, %s440
        %p442 = pneg %p151
        %p443 = pneg %p148
        %s444 = sld [smem:[#allocation4 + %s33]]
        %s445 = sld [smem:[#allocation5]]
        %p446 = scmp.ge.s32.totalorder %s33, %s445
        %s447 = scalar_select %p446, 1, 0
        %s448 = ssub.s32 0, %s34
        %s449 = smul.u32 %s447, %s448
        %s450 = sadd.s32 %s34, %s449
        %p451 = scmp.lt.s32.totalorder %s444, 15
        %s452 = scalar_select %p451, %s444, 15
        %p453 = scmp.lt.s32.totalorder %s450, 0
        %s454 = scalar_select %p453, %s450, 0
        %s455 = smul.addr %s452, 16
        %s456 = sadd.s32 %s454, %s455
        %s457 = smul.addr %s456, 4
        %s458 = scalar_lea.vmem %s5, %s457
        %p459 = pneg %p193
        %p460 = pneg %p190
        %p461 = scmp.lt.s32.totalorder %s33, 15
        %s462 = scalar_select %p461, %s33, 15
        %p463 = scmp.lt.s32.totalorder %s32, 0
        %s464 = scalar_select %p463, %s32, 0
        %s465 = sadd.s32 %s464, %s462
        %s466 = smul.addr %s465, 8
        %s467 = scalar_lea.vmem %s6, %s466
        %p468 = pneg %p221
        %p469 = pneg %p218
        %p470 = scmp.lt.s32.totalorder %s32, 0
        %s471 = scalar_select %p470, %s32, 0
        %s472 = smul.addr %s471, 4
        %s473 = scalar_lea.vmem %s7, %s472
        %p474 = pneg %p247
        %p475 = pneg %p244
        %p476 = pneg %p273
        %p477 = pneg %p270
        %p478 = scmp.lt.s32.totalorder %s32, 0
        %s479 = scalar_select %p478, %s32, 0
        %s480 = smul.addr %s479, 4
        %s481 = scalar_lea.vmem %s2, %s480
        %s482 = sld [smem:[#allocation4 + %s33]]
        %s483 = sld [smem:[#allocation5]]
        %p484 = scmp.ge.s32.totalorder %s33, %s483
        %s485 = scalar_select %p484, 1, 0
        %s486 = ssub.s32 0, %s34
        %s487 = smul.u32 %s485, %s486
        %s488 = sadd.s32 %s34, %s487
        %s489 = smul.u32 8, %s488
        %p490 = scmp.lt.s32.totalorder %s482, 15
        %s491 = scalar_select %p490, %s482, 15
        %p492 = scmp.lt.s32.totalorder %s489, 7
        %s493 = scalar_select %p492, %s489, 7
        %s494 = smul.addr %s491, 8
        %s495 = sadd.s32 %s493, %s494
        %s496 = smul.addr %s495, 4
        %s497 = scalar_lea.vmem %s3, %s496
        %s498 = sld [smem:[#allocation4 + %s33]]
        %s499 = sld [smem:[#allocation5]]
        %p500 = scmp.ge.s32.totalorder %s33, %s499
        %s501 = scalar_select %p500, 1, 0
        %s502 = ssub.s32 0, %s34
        %s503 = smul.u32 %s501, %s502
        %s504 = sadd.s32 %s34, %s503
        %s505 = smul.u32 8, %s504
        %s506 = sld [smem:[#allocation4 + %s33]]
        %s507 = sld [smem:[#allocation5]]
        %p508 = scmp.ge.s32.totalorder %s33, %s507
        %s509 = scalar_select %p508, 1, 0
        %s510 = ssub.s32 0, %s34
        %s511 = smul.u32 %s509, %s510
        %s512 = sadd.s32 %s34, %s511
        %s513 = smul.u32 8, %s512
        %p514 = scmp.lt.s32.totalorder %s506, 15
        %s515 = scalar_select %p514, %s506, 15
        %p516 = scmp.lt.s32.totalorder %s513, 7
        %s517 = scalar_select %p516, %s513, 7
        %s518 = smul.addr %s515, 8
        %s519 = sadd.s32 %s517, %s518
        %s520 = smul.addr %s519, 4
        %s521 = scalar_lea.vmem %s4, %s520
        %s522 = sld [smem:[#allocation4 + %s33]]
        %s523 = sld [smem:[#allocation5]]
        %p524 = scmp.ge.s32.totalorder %s33, %s523
        %s525 = scalar_select %p524, 1, 0
        %s526 = ssub.s32 0, %s34
        %s527 = smul.u32 %s525, %s526
        %s528 = sadd.s32 %s34, %s527
        %s529 = smul.u32 8, %s528
        %s530 = sld [smem:[#allocation4 + %s33]]
        %s531 = sld [smem:[#allocation5]]
        %p532 = scmp.ge.s32.totalorder %s33, %s531
        %s533 = scalar_select %p532, 1, 0
        %s534 = ssub.s32 0, %s34
        %s535 = smul.u32 %s533, %s534
        %s536 = sadd.s32 %s34, %s535
        %p537 = scmp.lt.s32.totalorder %s530, 15
        %s538 = scalar_select %p537, %s530, 15
        %p539 = scmp.lt.s32.totalorder %s536, 0
        %s540 = scalar_select %p539, %s536, 0
        %s541 = smul.addr %s538, 16
        %s542 = sadd.s32 %s540, %s541
        %s543 = smul.addr %s542, 4
        %s544 = scalar_lea.vmem %s5, %s543
        %s545 = sld [smem:[#allocation4 + %s33]]
        %s546 = sld [smem:[#allocation5]]
        %p547 = scmp.ge.s32.totalorder %s33, %s546
        %s548 = scalar_select %p547, 1, 0
        %s549 = ssub.s32 0, %s34
        %s550 = smul.u32 %s548, %s549
        %s551 = sadd.s32 %s34, %s550
        %p552 = scmp.lt.s32.totalorder %s33, 15
        %s553 = scalar_select %p552, %s33, 15
        %p554 = scmp.lt.s32.totalorder %s32, 0
        %s555 = scalar_select %p554, %s32, 0
        %s556 = sadd.s32 %s555, %s553
        %s557 = smul.addr %s556, 8
        %s558 = scalar_lea.vmem %s6, %s557
        %p559 = scmp.lt.s32.totalorder %s32, 0
        %s560 = scalar_select %p559, %s32, 0
        %s561 = smul.addr %s560, 4
        %s562 = scalar_lea.vmem %s7, %s561
        %p564 = scmp.eq.s32.totalorder %s33, 0
        %p565 = scmp.eq.s32.totalorder %s34, 0
        %p566 = pnand %p564, %p565
        %p567 = pneg %p566
        // Predicated region
        $region45: #{deepseekv3_moe_forward.3} parent=43 // pred_check
          _
        $region46: #{deepseekv3_moe_forward.3} parent=43 // pred_check_branch
          %569 = sbr.rel (%p566) target = $region48
        $region47: #{deepseekv3_moe_forward.3} parent=43 // pred_region
          %v570 = vld [vmem:[%s562] sm:$0xf]
          %v571 = vunpack.c.l.bf16 %v570
          %572 = vst [vmem:[#allocation2] sm:$0xff] %v571
        $region48: #{deepseekv3_moe_forward.3} parent=43 // pred_fallthru
          _
        %s573 = sld [smem:[#allocation5]]
        %p574 = scmp.lt.s32.totalorder %s33, %s573
        // Predicated region
        $region49: #{deepseekv3_moe_forward.3} parent=43 // pred_check
          %p575 = pneg %p574
        $region50: #{deepseekv3_moe_forward.3} parent=43 // pred_check_branch
          %577 = sbr.rel (%p575) target = $region52
        $region51: #{deepseekv3_moe_forward.3} parent=43 // pred_region
          %v578 = vld [vmem:[%s481] sm:$0xf]
          %v579 = vld [vmem:[%s497] sm:$0xf]
          %v580 = vld [vmem:[%s497 + $0x4] sm:$0xf]
          %v581 = vld [vmem:[%s497 + $0x8] sm:$0xf]
          %v582 = vld [vmem:[%s497 + $0xc] sm:$0xf]
          %v583 = vld [vmem:[%s497 + $0x10] sm:$0xf]
          %v584 = vld [vmem:[%s497 + $0x14] sm:$0xf]
          %v585 = vld [vmem:[%s497 + $0x18] sm:$0xf]
          %v586 = vld [vmem:[%s497 + $0x1c] sm:$0xf]
          %v587 = vld [vmem:[%s521] sm:$0xf]
          %v588 = vld [vmem:[%s521 + $0x4] sm:$0xf]
          %v589 = vld [vmem:[%s521 + $0x8] sm:$0xf]
          %v590 = vld [vmem:[%s521 + $0xc] sm:$0xf]
          %v591 = vld [vmem:[%s521 + $0x10] sm:$0xf]
          %v592 = vld [vmem:[%s521 + $0x14] sm:$0xf]
          %v593 = vld [vmem:[%s521 + $0x18] sm:$0xf]
          %v594 = vld [vmem:[%s521 + $0x1c] sm:$0xf]
          %v595 = vld [vmem:[%s544] sm:$0xf]
          %v596 = vld [vmem:[%s544 + $0x4] sm:$0xf]
          %v597 = vld [vmem:[%s544 + $0x8] sm:$0xf]
          %v598 = vld [vmem:[%s544 + $0xc] sm:$0xf]
          %v599 = vld [vmem:[%s544 + $0x10] sm:$0xf]
          %v600 = vld [vmem:[%s544 + $0x14] sm:$0xf]
          %v601 = vld [vmem:[%s544 + $0x18] sm:$0xf]
          %v602 = vld [vmem:[%s544 + $0x1c] sm:$0xf]
          %v603 = vld [vmem:[%s544 + $0x20] sm:$0xf]
          %v604 = vld [vmem:[%s544 + $0x24] sm:$0xf]
          %v605 = vld [vmem:[%s544 + $0x28] sm:$0xf]
          %v606 = vld [vmem:[%s544 + $0x2c] sm:$0xf]
          %v607 = vld [vmem:[%s544 + $0x30] sm:$0xf]
          %v608 = vld [vmem:[%s544 + $0x34] sm:$0xf]
          %v609 = vld [vmem:[%s544 + $0x38] sm:$0xf]
          %v610 = vld [vmem:[%s544 + $0x3c] sm:$0xf]
          %v619 = vunpack.c.l.b16 %v579
          %v620 = vunpack.c.l.b16 %v580
          %v621 = vunpack.c.l.b16 %v581
          %v622 = vunpack.c.l.b16 %v582
          %v623 = vunpack.c.l.b16 %v583
          %v624 = vunpack.c.l.b16 %v584
          %v625 = vunpack.c.l.b16 %v585
          %v626 = vunpack.c.l.b16 %v586
          %v627 = vpack.c.b16 %v620, %v619
          %v628 = vpack.c.b16 %v622, %v621
          %v629 = vpack.c.b16 %v624, %v623
          %v630 = vpack.c.b16 %v626, %v625
          %635 = vmatprep.subr.bf16.mxu0 0
          %636 = vmatpush1.bf16.xpose.msra.mxu0 %v627
          %637 = vmatprep.subr.bf16.mxu0 0
          %638 = vmatpush1.bf16.xpose.msra.mxu0 %v628
          %639 = vmatprep.subr.bf16.mxu0 0
          %640 = vmatpush1.bf16.xpose.msra.mxu0 %v629
          %641 = vmatprep.subr.bf16.mxu0 0
          %642 = vmatpush1.bf16.xpose.msra.mxu0 %v630
          %643 = vmatprep.subr.bf16.mxu0 0
          %644 = vmatpush1.bf16.xpose.msra.mxu0 0
          %645 = vmatprep.subr.bf16.mxu0 0
          %646 = vmatpush1.bf16.xpose.msra.mxu0 0
          %647 = vmatprep.subr.bf16.mxu0 0
          %648 = vmatpush1.bf16.xpose.msra.mxu0 0
          %649 = vmatprep.subr.bf16.mxu0 0
          %650 = vmatpush1.bf16.xpose.msra.mxu0 0
          %651 = vmatprep.subr.bf16.mxu0 0
          %652 = vmatpush1.bf16.xpose.msra.mxu0 0
          %653 = vmatprep.subr.bf16.mxu0 0
          %654 = vmatpush1.bf16.xpose.msra.mxu0 0
          %655 = vmatprep.subr.bf16.mxu0 0
          %656 = vmatpush1.bf16.xpose.msra.mxu0 0
          %657 = vmatprep.subr.bf16.mxu0 0
          %658 = vmatpush1.bf16.xpose.msra.mxu0 0
          %659 = vmatprep.subr.bf16.mxu0 0
          %660 = vmatpush1.bf16.xpose.msra.mxu0 0
          %661 = vmatprep.subr.bf16.mxu0 0
          %662 = vmatpush1.bf16.xpose.msra.mxu0 0
          %663 = vmatprep.subr.bf16.mxu0 0
          %664 = vmatpush1.bf16.xpose.msra.mxu0 0
          %665 = vmatprep.subr.bf16.mxu0 0
          %666 = vmatpush1.bf16.xpose.msra.mxu0 0
          %667 = vmatprep.mubr.bf16.mxu0 0
          %668 = vmatmul.mubr.bf16.gmra.mrb[0].mxu0 %v578
          %v669 = vpop.f32.mrb[0].mxu0
          %v670 = vadd.f32 0.0, %v669
          %v671 = vpop.f32.mrb[0].mxu0
          %v672 = vpop.f32.mrb[0].mxu0
          %v673 = vpop.f32.mrb[0].mxu0
          %674 = vdwg.mxu0
          %v683 = vunpack.c.l.b16 %v587
          %v684 = vunpack.c.l.b16 %v588
          %v685 = vunpack.c.l.b16 %v589
          %v686 = vunpack.c.l.b16 %v590
          %v687 = vunpack.c.l.b16 %v591
          %v688 = vunpack.c.l.b16 %v592
          %v689 = vunpack.c.l.b16 %v593
          %v690 = vunpack.c.l.b16 %v594
          %v691 = vpack.c.b16 %v684, %v683
          %v692 = vpack.c.b16 %v686, %v685
          %v693 = vpack.c.b16 %v688, %v687
          %v694 = vpack.c.b16 %v690, %v689
          %699 = vmatprep.subr.bf16.mxu0 0
          %700 = vmatpush1.bf16.xpose.msra.mxu0 %v691
          %701 = vmatprep.subr.bf16.mxu0 0
          %702 = vmatpush1.bf16.xpose.msra.mxu0 %v692
          %703 = vmatprep.subr.bf16.mxu0 0
          %704 = vmatpush1.bf16.xpose.msra.mxu0 %v693
          %705 = vmatprep.subr.bf16.mxu0 0
          %706 = vmatpush1.bf16.xpose.msra.mxu0 %v694
          %707 = vmatprep.subr.bf16.mxu0 0
          %708 = vmatpush1.bf16.xpose.msra.mxu0 0
          %709 = vmatprep.subr.bf16.mxu0 0
          %710 = vmatpush1.bf16.xpose.msra.mxu0 0
          %711 = vmatprep.subr.bf16.mxu0 0
          %712 = vmatpush1.bf16.xpose.msra.mxu0 0
          %713 = vmatprep.subr.bf16.mxu0 0
          %714 = vmatpush1.bf16.xpose.msra.mxu0 0
          %715 = vmatprep.subr.bf16.mxu0 0
          %716 = vmatpush1.bf16.xpose.msra.mxu0 0
          %717 = vmatprep.subr.bf16.mxu0 0
          %718 = vmatpush1.bf16.xpose.msra.mxu0 0
          %719 = vmatprep.subr.bf16.mxu0 0
          %720 = vmatpush1.bf16.xpose.msra.mxu0 0
          %721 = vmatprep.subr.bf16.mxu0 0
          %722 = vmatpush1.bf16.xpose.msra.mxu0 0
          %723 = vmatprep.subr.bf16.mxu0 0
          %724 = vmatpush1.bf16.xpose.msra.mxu0 0
          %725 = vmatprep.subr.bf16.mxu0 0
          %726 = vmatpush1.bf16.xpose.msra.mxu0 0
          %727 = vmatprep.subr.bf16.mxu0 0
          %728 = vmatpush1.bf16.xpose.msra.mxu0 0
          %729 = vmatprep.subr.bf16.mxu0 0
          %730 = vmatpush1.bf16.xpose.msra.mxu0 0
          %731 = vmatprep.mubr.bf16.mxu0 0
          %732 = vmatmul.mubr.bf16.gmra.mrb[0].mxu0 %v578
          %v733 = vpop.f32.mrb[0].mxu0
          %v734 = vadd.f32 0.0, %v733
          %v735 = vpop.f32.mrb[0].mxu0
          %v736 = vpop.f32.mrb[0].mxu0
          %v737 = vpop.f32.mrb[0].mxu0
          %738 = vdwg.mxu0
          %v739 = vxor.u32 %v670, 2147483648
          %v740 = vmul.f32 %v739, 1.442695
          %v741 = vpow.pop %v740
          %v742 = vadd.f32 %v741, 1.0
          %v743 = vrcp.pop %v742
          %v744 = vmul.f32 1.0, %v743
          %v745 = vmul.f32 %v670, %v744
          %v746 = vmul.f32 %v745, %v734
          %v747 = vld [vmem:[%s558] sm:$0xff]
          %749 = vset.pattern.permute.xlu0 0
          %750 = vperm.xlu0 %749, %v747
          %v751 = vpop.permute.xlu0 %750
          %v753 = vmul.f32 %v746, %v751
          %v754 = vld [vmem:[#allocation2] sm:$0xff]
          %v755 = vpack.c.bf16 %v753, %v753
          %v772 = vunpack.c.l.b16 %v595
          %v773 = vunpack.c.l.b16 %v596
          %v774 = vunpack.c.l.b16 %v597
          %v775 = vunpack.c.l.b16 %v598
          %v776 = vunpack.c.l.b16 %v599
          %v777 = vunpack.c.l.b16 %v600
          %v778 = vunpack.c.l.b16 %v601
          %v779 = vunpack.c.l.b16 %v602
          %v780 = vunpack.c.l.b16 %v603
          %v781 = vunpack.c.l.b16 %v604
          %v782 = vunpack.c.l.b16 %v605
          %v783 = vunpack.c.l.b16 %v606
          %v784 = vunpack.c.l.b16 %v607
          %v785 = vunpack.c.l.b16 %v608
          %v786 = vunpack.c.l.b16 %v609
          %v787 = vunpack.c.l.b16 %v610
          %v788 = vpack.c.b16 %v773, %v772
          %v789 = vpack.c.b16 %v775, %v774
          %v790 = vpack.c.b16 %v777, %v776
          %v791 = vpack.c.b16 %v779, %v778
          %v792 = vpack.c.b16 %v781, %v780
          %v793 = vpack.c.b16 %v783, %v782
          %v794 = vpack.c.b16 %v785, %v784
          %v795 = vpack.c.b16 %v787, %v786
          %vm796 = vcmask 523264
          %v798 = vsel %vm796, %v755, 0
          %v801 = vsel %vm796, %v788, 0
          %v804 = vsel %vm796, %v789, 0
          %v807 = vsel %vm796, %v790, 0
          %v810 = vsel %vm796, %v791, 0
          %v813 = vsel %vm796, %v792, 0
          %v816 = vsel %vm796, %v793, 0
          %v819 = vsel %vm796, %v794, 0
          %v822 = vsel %vm796, %v795, 0
          %824 = vmatprep.subr.bf16.mxu0 0
          %825 = vmatpush1.bf16.xpose.msra.mxu0 %v801
          %826 = vmatprep.subr.bf16.mxu0 0
          %827 = vmatpush1.bf16.xpose.msra.mxu0 %v804
          %828 = vmatprep.subr.bf16.mxu0 0
          %829 = vmatpush1.bf16.xpose.msra.mxu0 %v807
          %830 = vmatprep.subr.bf16.mxu0 0
          %831 = vmatpush1.bf16.xpose.msra.mxu0 %v810
          %832 = vmatprep.subr.bf16.mxu0 0
          %833 = vmatpush1.bf16.xpose.msra.mxu0 %v813
          %834 = vmatprep.subr.bf16.mxu0 0
          %835 = vmatpush1.bf16.xpose.msra.mxu0 %v816
          %836 = vmatprep.subr.bf16.mxu0 0
          %837 = vmatpush1.bf16.xpose.msra.mxu0 %v819
          %838 = vmatprep.subr.bf16.mxu0 0
          %839 = vmatpush1.bf16.xpose.msra.mxu0 %v822
          %840 = vmatprep.subr.bf16.mxu0 0
          %841 = vmatpush1.bf16.xpose.msra.mxu0 0
          %842 = vmatprep.subr.bf16.mxu0 0
          %843 = vmatpush1.bf16.xpose.msra.mxu0 0
          %844 = vmatprep.subr.bf16.mxu0 0
          %845 = vmatpush1.bf16.xpose.msra.mxu0 0
          %846 = vmatprep.subr.bf16.mxu0 0
          %847 = vmatpush1.bf16.xpose.msra.mxu0 0
          %848 = vmatprep.subr.bf16.mxu0 0
          %849 = vmatpush1.bf16.xpose.msra.mxu0 0
          %850 = vmatprep.subr.bf16.mxu0 0
          %851 = vmatpush1.bf16.xpose.msra.mxu0 0
          %852 = vmatprep.subr.bf16.mxu0 0
          %853 = vmatpush1.bf16.xpose.msra.mxu0 0
          %854 = vmatprep.subr.bf16.mxu0 0
          %855 = vmatpush1.bf16.xpose.msra.mxu0 0
          %856 = vmatprep.mubr.bf16.mxu0 0
          %857 = vmatmul.mubr.bf16.gmra.mrb[0].mxu0 %v798
          %v858 = vpop.f32.mrb[0].mxu0
          %v859 = vadd.f32 0.0, %v858
          %v860 = vpop.f32.mrb[0].mxu0
          %v861 = vpop.f32.mrb[0].mxu0
          %v862 = vpop.f32.mrb[0].mxu0
          %863 = vdwg.mxu0
          %v864 = vadd.f32 %v754, %v859
          %865 = vst [vmem:[#allocation2] sm:$0xff] %v864
        $region52: #{deepseekv3_moe_forward.3} parent=43 // pred_fallthru
          _
        %p866 = scmp.eq.s32.totalorder %s33, 15
        %p867 = pnand %p866, %p565
        %p868 = pneg %p867
        // Predicated region
        $region53: #{deepseekv3_moe_forward.3} parent=43 // pred_check
          _
        $region54: #{deepseekv3_moe_forward.3} parent=43 // pred_check_branch
          %870 = sbr.rel (%p867) target = $region56
        $region55: #{deepseekv3_moe_forward.3} parent=43 // pred_region
          %v871 = vld [vmem:[#allocation2] sm:$0xff]
          %v872 = vpack.c.bf16 %v871, %v871
          %873 = vst [vmem:[#allocation6] sm:$0xf] %v872
        $region56: #{deepseekv3_moe_forward.3} parent=43 // pred_fallthru
          _
        // Predicated region
        $region57: #{deepseekv3_moe_forward.3} parent=43 // pred_check
          %p874 = pneg %p270
        $region58: #{deepseekv3_moe_forward.3} parent=43 // pred_check_branch
          %876 = sbr.rel (%p874) target = $region60
        $region59: #{deepseekv3_moe_forward.3} parent=43 // pred_region
          %s878 = ssub.s32 64, 64
          %879 = vsyncadd [#allocation7], %s878
          %s880 = smul.addr %s32, 64
          %s881 = scalar_lea.hbm %s8, %s880
          %s883 = sshll.u32 [#allocation6], 4
          %s884 = int_to_ptr.vmem [resolvable:$true] %s883
          %886 = dma.vmem_to_hbm [thread:$0]  %s884, 64, %s881, [#allocation7]
        $region60: #{deepseekv3_moe_forward.3} parent=43 // pred_fallthru
          _
        // Predicated region
        $region61: #{deepseekv3_moe_forward.3} parent=43 // pred_check
          %p887 = pneg %p270
        $region62: #{deepseekv3_moe_forward.3} parent=43 // pred_check_branch
          %889 = sbr.rel (%p887) target = $region64
        $region63: #{deepseekv3_moe_forward.3} parent=43 // pred_region
          %890 = dma.done [#allocation7], 64
        $region64: #{deepseekv3_moe_forward.3} parent=43 // pred_fallthru
          _
      $region44: #{deepseekv3_moe_forward.3} parent=5 // pred_fallthru
        _
      %p891 = scmp.le.s32.totalorder 2, %s22
      // Predicated region
      $region65: #{deepseekv3_moe_forward.3} parent=5 // pred_check
        %p892 = pneg %p891
      $region66: #{deepseekv3_moe_forward.3} parent=5 // pred_check_branch
        %894 = sbr.rel (%p892) target = $region68
      $region67: #{deepseekv3_moe_forward.3} parent=5 // pred_region
        %s895 = ssub.s32 %s22, 2
      $region68: #{deepseekv3_moe_forward.3} parent=5 // pred_fallthru
        _
    $region6: #{deepseekv3_moe_forward.3} parent=1 // loop_footer
      %s26 = sadd.s32 1, %s22
    $region7: #{deepseekv3_moe_forward.3} parent=1 // loop_footer_branch
      %21 = sbr.rel target = $region3
    $region8: #{deepseekv3_moe_forward.3} parent=1 // loop_exit
      _
    %896 = vsyncpa [#allocation7], 1
    %s897 = scalar_lea.sflag [#allocation7], 1
    %898 = vsyncpa %s897, 1

</llo_original>
